<compile_context>
chip_gen: v6e
topology: v6e:2x2x1
jax: 0.10.0
libtpu: 0.0.40
codegen_flags: <defaults>
</compile_context>

<pallas_src>
import functools
import math

import jax
import jax.numpy as jnp
from jax import lax
from jax.experimental import pallas as pl
from jax.experimental.pallas import tpu as pltpu


def resblock_kernel(x_ref, w1_ref, b1_ref, w2_ref, gamma_ref, beta_ref,
                    imask_ref, vmask_ref, out_ref,
                    resid_scr, sum_scr, sq_scr, *, wpp, inv_count, eps):
    """Fused ResBlock forward.

    x_ref:     (1, C, L)    zero-padded-by-2 image, flattened spatial (lane) axis
    w1_ref:    (Cp, C)      conv1 weight, output channels padded to Cp
    b1_ref:    (Cp, 1)      conv1 bias
    w2_ref:    (Cp, 9*Cp)   conv2 taps, repacked for the stacked-K matmul
    gamma/beta:(1, Cp, 1)   per-image FiLM
    imask:     (1, L)       1.0 on the interior (H+2)x(W+2) region
    vmask:     (1, L)       1.0 on valid conv2 output positions
    out_ref:   (1, C, L)    final output (lane-dense)
    scratch:   resid_scr (N, Cp, L) persistent conv1 output,
               sum_scr/sq_scr (Cp, 1) BN accumulators -> mean / inv_std.
    """
    phase = pl.program_id(0)
    n = pl.program_id(1)
    L = out_ref.shape[2]
    c_out = out_ref.shape[1]

    def conv2_stacked(resid_pad):
        # 9 lane-rotated views of the zero-framed conv1 output, stacked along
        # the contraction axis -> ONE MXU matmul (K = 9*Cp).
        taps = []
        for kh in range(3):
            for kw in range(3):
                off = kh * wpp + kw
                taps.append(resid_pad if off == 0
                            else pltpu.roll(resid_pad, L - off, axis=1))
        stacked = jnp.concatenate(taps, axis=0)                      # (9*Cp, L)
        return jnp.dot(w2_ref[...], stacked,
                       preferred_element_type=jnp.float32)           # (Cp, L)

    @pl.when(phase == 0)
    def _phase0():
        # conv1 (1x1) + bias + ReLU; the interior mask makes this exactly the
        # zero-padded-by-1 input grid of conv2.
        h1 = jnp.dot(w1_ref[...], x_ref[0], preferred_element_type=jnp.float32)
        resid_pad = jnp.maximum(h1 + b1_ref[...], 0.0) * imask_ref[...]  # (Cp, L)
        resid_scr[n] = resid_pad

        # conv2 + masked BatchNorm partial sums, accumulated across the batch
        # entirely in VMEM (no HBM round trip of the (N,C,L) intermediates).
        acc = conv2_stacked(resid_pad)
        m = acc * vmask_ref[...]

        @pl.when(n == 0)
        def _():
            sum_scr[...] = jnp.zeros_like(sum_scr)
            sq_scr[...] = jnp.zeros_like(sq_scr)

        sum_scr[...] += jnp.sum(m, axis=1, keepdims=True)
        sq_scr[...] += jnp.sum(m * acc, axis=1, keepdims=True)

    @pl.when(phase == 1)
    def _phase1():
        # Finalize the batch statistics exactly once (first phase-1 step),
        # in place: sum_scr -> mean, sq_scr -> inv_std.
        @pl.when(n == 0)
        def _():
            mean = sum_scr[...] * inv_count
            ex2 = sq_scr[...] * inv_count
            # E[x^2] - E[x]^2 in f32; clamp guards tiny negative round-off.
            var = jnp.maximum(ex2 - mean * mean, 0.0)
            sum_scr[...] = mean
            sq_scr[...] = lax.rsqrt(var + eps)

        resid_pad = resid_scr[n]                                     # (Cp, L)
        # Recompute conv2 from the resident conv1 output (cheaper than an HBM
        # round trip or a 2x larger persistent scratch).
        acc = conv2_stacked(resid_pad)
        normed = (acc - sum_scr[...]) * sq_scr[...]
        film = gamma_ref[0] * normed + beta_ref[0]
        # residual aligned with the conv2 output grid.
        resid = pltpu.roll(resid_pad, L - (wpp + 1), axis=1)
        out = (jnp.maximum(film, 0.0) + resid) * vmask_ref[...]
        out_ref[0] = out[:c_out].astype(out_ref.dtype)


def resblock_forward(x_nchw, gamma, beta, w1_oihw, b1, w2_oihw):
    """x: (N,C,H,W); gamma/beta: (N,C). Returns (N, C, H+2, W+2) (conv1 is a
    1x1 conv with padding=1, so spatial grows by 2, matching PyTorch)."""
    N, C, H, W = x_nchw.shape
    Hp, Wp = H + 2, W + 2            # conv1 / final output spatial size
    Hpp, Wpp = H + 4, W + 4          # conv2 input grid (resid zero-padded by 1)
    L = ((Hpp * Wpp + 127) // 128) * 128   # lane-aligned flattened spatial axis
    Cp = ((C + 7) // 8) * 8                # f32 sublane-aligned channel dim

    # ---- layout glue (tiny parameter repacking + input pad) ----
    x_pad = jnp.pad(x_nchw.astype(jnp.float32), ((0, 0), (0, 0), (2, 2), (2, 2)))
    x_flat = jnp.pad(x_pad.reshape(N, C, Hpp * Wpp),
                     ((0, 0), (0, 0), (0, L - Hpp * Wpp)))

    w1_k = jnp.zeros((Cp, C), jnp.float32).at[:C].set(
        w1_oihw[:, :, 0, 0].astype(jnp.float32))                       # (Cp, C)
    b1_k = jnp.zeros((Cp, 1), jnp.float32).at[:C].set(
        b1.astype(jnp.float32).reshape(C, 1))                          # (Cp, 1)
    # conv2 taps, tap-major along the contraction axis: w2_k[co, t*Cp + ci]
    w2_t = jnp.transpose(w2_oihw.astype(jnp.float32), (0, 2, 3, 1))    # (C,3,3,C)
    w2_k = jnp.zeros((Cp, 3, 3, Cp), jnp.float32).at[:C, :, :, :C].set(
        w2_t).reshape(Cp, 9 * Cp)                                      # (Cp, 9Cp)
    gamma_k = jnp.zeros((N, Cp, 1), jnp.float32).at[:, :C].set(
        gamma.astype(jnp.float32)[..., None])
    beta_k = jnp.zeros((N, Cp, 1), jnp.float32).at[:, :C].set(
        beta.astype(jnp.float32)[..., None])

    idx = jnp.arange(L)
    ii, jj = idx // Wpp, idx % Wpp
    in_grid = idx < Hpp * Wpp
    interior = in_grid & (ii >= 1) & (ii <= Hp) & (jj >= 1) & (jj <= Wp)
    valid = in_grid & (ii < Hp) & (jj < Wp)
    imask = interior.astype(jnp.float32).reshape(1, L)
    vmask = valid.astype(jnp.float32).reshape(1, L)

    # ---- VMEM budget: keep the resident scratch + pipeline buffers under a
    # conservative 48 MiB so the fused scheme fits v7x's 64 MiB/TC as well as
    # v5e/v6e's 128 MiB. ----
    resident_bytes = (N * Cp * L + 2 * Cp) * 4
    pipeline_bytes = 2 * 2 * (C * L * 4)                 # double-buffered x/out
    param_bytes = (Cp * C + Cp + Cp * 9 * Cp + 2 * N * Cp + 2 * L) * 4 * 2
    need = resident_bytes + pipeline_bytes + param_bytes
    budget = 48 * 1024 * 1024
    assert need <= budget, (need, budget)
    vmem_limit = int(min(budget, max(32 * 1024 * 1024, 2 * need)))

    # ---- fused kernel: grid = (phase, image); phase 0 builds stats + resident
    # conv1 output, phase 1 finalizes BN and writes the output. Both axes are
    # 'arbitrary' (stats/scratch carry across the whole grid). ----
    out_flat = pl.pallas_call(
        functools.partial(resblock_kernel, wpp=Wpp,
                          inv_count=1.0 / float(N * Hp * Wp), eps=1e-5),
        grid=(2, N),
        in_specs=[
            # x only feeds phase 0; pin the block in phase 1 to avoid refetches
            pl.BlockSpec((1, C, L), lambda p, n: ((1 - p) * n, 0, 0)),
            pl.BlockSpec((Cp, C), lambda p, n: (0, 0)),           # w1
            pl.BlockSpec((Cp, 1), lambda p, n: (0, 0)),           # b1
            pl.BlockSpec((Cp, 9 * Cp), lambda p, n: (0, 0)),      # w2 (stacked)
            pl.BlockSpec((1, Cp, 1), lambda p, n: (n, 0, 0)),     # gamma
            pl.BlockSpec((1, Cp, 1), lambda p, n: (n, 0, 0)),     # beta
            pl.BlockSpec((1, L), lambda p, n: (0, 0)),            # interior mask
            pl.BlockSpec((1, L), lambda p, n: (0, 0)),            # valid mask
        ],
        # phase 0 keeps the out index pinned at block 0 (no garbage writebacks);
        # phase 1 writes each image's block exactly once.
        out_specs=pl.BlockSpec((1, C, L), lambda p, n: (p * n, 0, 0)),
        out_shape=jax.ShapeDtypeStruct((N, C, L), jnp.float32),
        scratch_shapes=[
            pltpu.VMEM((N, Cp, L), jnp.float32),   # resid_pad, resident across phases
            pltpu.VMEM((Cp, 1), jnp.float32),      # BN sum   -> mean
            pltpu.VMEM((Cp, 1), jnp.float32),      # BN sumsq -> inv_std
        ],
        compiler_params=pltpu.CompilerParams(
            dimension_semantics=("arbitrary", "arbitrary"),
            vmem_limit_bytes=vmem_limit),
    )(x_flat, w1_k, b1_k, w2_k, gamma_k, beta_k, imask, vmask)

    # unpack the lane-dense flat layout back to NCHW (glue)
    out = out_flat[:, :, :Hp * Wpp].reshape(N, C, Hp, Wpp)[:, :, :, :Wp]
    return out


def resblock_reference(x, gamma, beta, w1_oihw, b1, w2_oihw):
    dn = ('NCHW', 'OIHW', 'NCHW')
    hi = lax.Precision.HIGHEST
    out = lax.conv_general_dilated(x, w1_oihw, (1, 1), ((1, 1), (1, 1)),
                                   dimension_numbers=dn, precision=hi)
    out = out + b1[None, :, None, None]
    resid = jnp.maximum(out, 0.0)
    out = lax.conv_general_dilated(resid, w2_oihw, (1, 1), ((1, 1), (1, 1)),
                                   dimension_numbers=dn, precision=hi)
    mean = jnp.mean(out, axis=(0, 2, 3), keepdims=True)
    var = jnp.mean((out - mean) ** 2, axis=(0, 2, 3), keepdims=True)
    out = (out - mean) / jnp.sqrt(var + 1e-5)
    out = gamma[:, :, None, None] * out + beta[:, :, None, None]
    out = jnp.maximum(out, 0.0) + resid
    return out


if __name__ == "__main__":
    N, C, H, W = 2, 4, 16, 16
    key = jax.random.PRNGKey(0)
    kx, kg, kb, kw1, kb1, kw2 = jax.random.split(key, 6)

    x = jax.random.normal(kx, (N, C, H, W), jnp.float32)
    gamma = 1.0 + 0.1 * jax.random.normal(kg, (N, C), jnp.float32)
    beta = 0.1 * jax.random.normal(kb, (N, C), jnp.float32)

    # Parameter shapes follow ResBlock.__init__(filter_size=C).
    w1 = jax.random.normal(kw1, (C, C, 1, 1), jnp.float32) / math.sqrt(C)       # conv1.weight
    b1 = 0.1 * jax.random.normal(kb1, (C,), jnp.float32)                        # conv1.bias
    w2 = jax.random.normal(kw2, (C, C, 3, 3), jnp.float32) / math.sqrt(9 * C)   # conv2.weight

    out = jax.jit(resblock_forward)(x, gamma, beta, w1, b1, w2)
    out = jax.block_until_ready(out)

    ref = resblock_reference(x, gamma, beta, w1, b1, w2)
    err = float(jnp.max(jnp.abs(out - ref)))
    assert out.shape == (N, C, H + 2, W + 2), out.shape
    assert err < 5e-4, f"max abs err {err}"
    print("KERNEL_OK")
</pallas_src>

<mosaic_0001>
module attributes {stable_mosaic.version = 11 : i64} {
  func.func @resblock_kernel(%arg0: i32, %arg1: i32, %arg2: memref<1x4x512xf32, #tpu.memory_space<vmem>>, %arg3: memref<8x4xf32, #tpu.memory_space<vmem>>, %arg4: memref<8x1xf32, #tpu.memory_space<vmem>>, %arg5: memref<8x72xf32, #tpu.memory_space<vmem>>, %arg6: memref<1x8x1xf32, #tpu.memory_space<vmem>>, %arg7: memref<1x8x1xf32, #tpu.memory_space<vmem>>, %arg8: memref<1x512xf32, #tpu.memory_space<vmem>>, %arg9: memref<1x512xf32, #tpu.memory_space<vmem>>, %arg10: memref<1x4x512xf32, #tpu.memory_space<vmem>>, %arg11: memref<2x8x512xf32, #tpu.memory_space<vmem>>, %arg12: memref<8x1xf32, #tpu.memory_space<vmem>>, %arg13: memref<8x1xf32, #tpu.memory_space<vmem>>) attributes {dimension_semantics = [#tpu.dimension_semantics<arbitrary>, #tpu.dimension_semantics<arbitrary>], iteration_bounds = array<i64: 2, 2>, scalar_prefetch = 0 : i64, scratch_operands = 3 : i64, tpu.core_type = #tpu.core_type<tc>, window_params = [{transform_indices = @transform_0, window_bounds = array<i64: 1, 4, 512>}, {pipeline_mode = #tpu.pipeline_mode<synchronous>, transform_indices = @transform_1, window_bounds = array<i64: 8, 4>}, {pipeline_mode = #tpu.pipeline_mode<synchronous>, transform_indices = @transform_2, window_bounds = array<i64: 8, 1>}, {pipeline_mode = #tpu.pipeline_mode<synchronous>, transform_indices = @transform_3, window_bounds = array<i64: 8, 72>}, {transform_indices = @transform_4, window_bounds = array<i64: 1, 8, 1>}, {transform_indices = @transform_5, window_bounds = array<i64: 1, 8, 1>}, {pipeline_mode = #tpu.pipeline_mode<synchronous>, transform_indices = @transform_6, window_bounds = array<i64: 1, 512>}, {pipeline_mode = #tpu.pipeline_mode<synchronous>, transform_indices = @transform_7, window_bounds = array<i64: 1, 512>}, {transform_indices = @transform_8, window_bounds = array<i64: 1, 4, 512>}]} {
    %c0_i32 = arith.constant 0 : i32
    %0 = arith.cmpi eq, %arg0, %c0_i32 : i32
    %1 = arith.extui %0 : i1 to i32
    %c0_i32_0 = arith.constant 0 : i32
    %2 = arith.cmpi ne, %1, %c0_i32_0 : i32
    scf.if %2 {
      %c0 = arith.constant 0 : index
      %c0_2 = arith.constant 0 : index
      %6 = vector.load %arg3[%c0, %c0_2] : memref<8x4xf32, #tpu.memory_space<vmem>>, vector<8x4xf32>
      %c0_3 = arith.constant 0 : index
      %c0_4 = arith.constant 0 : index
      %c0_5 = arith.constant 0 : index
      %7 = vector.load %arg2[%c0_3, %c0_4, %c0_5] : memref<1x4x512xf32, #tpu.memory_space<vmem>>, vector<1x4x512xf32>
      %8 = vector.shape_cast %7 : vector<1x4x512xf32> to vector<4x512xf32>
      %cst = arith.constant dense<0.000000e+00> : vector<8x512xf32>
      %9 = tpu.matmul %6, %8, %cst {dimension_numbers = #tpu.dot_dimension_numbers<[1], [0], [0], [1], [0, 0, 1, 1], [], []>} : vector<8x4xf32>, vector<4x512xf32>, vector<8x512xf32> -> vector<8x512xf32>
      %c0_6 = arith.constant 0 : index
      %c0_7 = arith.constant 0 : index
      %10 = vector.load %arg4[%c0_6, %c0_7] : memref<8x1xf32, #tpu.memory_space<vmem>>, vector<8x1xf32>
      %11 = vector.broadcast %10 : vector<8x1xf32> to vector<8x512xf32>
      %12 = arith.addf %9, %11 : vector<8x512xf32>
      %cst_8 = arith.constant 0.000000e+00 : f32
      %13 = vector.broadcast %cst_8 : f32 to vector<8x512xf32>
      %14 = arith.maximumf %12, %13 : vector<8x512xf32>
      %c0_9 = arith.constant 0 : index
      %c0_10 = arith.constant 0 : index
      %15 = vector.load %arg8[%c0_9, %c0_10] : memref<1x512xf32, #tpu.memory_space<vmem>>, vector<1x512xf32>
      %16 = vector.broadcast %15 : vector<1x512xf32> to vector<8x512xf32>
      %17 = arith.mulf %14, %16 : vector<8x512xf32>
      %18 = arith.index_cast %arg1 : i32 to index
      %c0_11 = arith.constant 0 : index
      %c0_12 = arith.constant 0 : index
      %19 = vector.load %arg11[%18, %c0_11, %c0_12] : memref<2x8x512xf32, #tpu.memory_space<vmem>>, vector<1x8x512xf32>
      %20 = vector.shape_cast %19 : vector<1x8x512xf32> to vector<8x512xf32>
      %21 = vector.shape_cast %17 : vector<8x512xf32> to vector<1x8x512xf32>
      tpu.vector_store %arg11[%18, %c0_11, %c0_12], %21 {strides = array<i32>} : memref<2x8x512xf32, #tpu.memory_space<vmem>>, vector<1x8x512xf32>,
      %c511_i32 = arith.constant 511 : i32
      %22 = tpu.dynamic_rotate %17 by %c511_i32 dim 1 : vector<8x512xf32>, i32 -> vector<8x512xf32>
      %c510_i32 = arith.constant 510 : i32
      %23 = tpu.dynamic_rotate %17 by %c510_i32 dim 1 : vector<8x512xf32>, i32 -> vector<8x512xf32>
      %c492_i32 = arith.constant 492 : i32
      %24 = tpu.dynamic_rotate %17 by %c492_i32 dim 1 : vector<8x512xf32>, i32 -> vector<8x512xf32>
      %c491_i32 = arith.constant 491 : i32
      %25 = tpu.dynamic_rotate %17 by %c491_i32 dim 1 : vector<8x512xf32>, i32 -> vector<8x512xf32>
      %c490_i32 = arith.constant 490 : i32
      %26 = tpu.dynamic_rotate %17 by %c490_i32 dim 1 : vector<8x512xf32>, i32 -> vector<8x512xf32>
      %c472_i32 = arith.constant 472 : i32
      %27 = tpu.dynamic_rotate %17 by %c472_i32 dim 1 : vector<8x512xf32>, i32 -> vector<8x512xf32>
      %c471_i32 = arith.constant 471 : i32
      %28 = tpu.dynamic_rotate %17 by %c471_i32 dim 1 : vector<8x512xf32>, i32 -> vector<8x512xf32>
      %c470_i32 = arith.constant 470 : i32
      %29 = tpu.dynamic_rotate %17 by %c470_i32 dim 1 : vector<8x512xf32>, i32 -> vector<8x512xf32>
      %30 = tpu.concatenate %17, %22, %23, %24, %25, %26, %27, %28, %29 in 0 : vector<8x512xf32>, vector<8x512xf32>, vector<8x512xf32>, vector<8x512xf32>, vector<8x512xf32>, vector<8x512xf32>, vector<8x512xf32>, vector<8x512xf32>, vector<8x512xf32> -> vector<72x512xf32>
      %c0_13 = arith.constant 0 : index
      %c0_14 = arith.constant 0 : index
      %31 = vector.load %arg5[%c0_13, %c0_14] : memref<8x72xf32, #tpu.memory_space<vmem>>, vector<8x72xf32>
      %cst_15 = arith.constant dense<0.000000e+00> : vector<8x512xf32>
      %32 = tpu.matmul %31, %30, %cst_15 {dimension_numbers = #tpu.dot_dimension_numbers<[1], [0], [0], [1], [0, 0, 1, 1], [], []>} : vector<8x72xf32>, vector<72x512xf32>, vector<8x512xf32> -> vector<8x512xf32>
      %c0_16 = arith.constant 0 : index
      %c0_17 = arith.constant 0 : index
      %33 = vector.load %arg9[%c0_16, %c0_17] : memref<1x512xf32, #tpu.memory_space<vmem>>, vector<1x512xf32>
      %34 = vector.broadcast %33 : vector<1x512xf32> to vector<8x512xf32>
      %35 = arith.mulf %32, %34 : vector<8x512xf32>
      %c0_i32_18 = arith.constant 0 : i32
      %36 = arith.cmpi eq, %arg1, %c0_i32_18 : i32
      %37 = arith.extui %36 : i1 to i32
      %c0_i32_19 = arith.constant 0 : i32
      %38 = arith.cmpi ne, %37, %c0_i32_19 : i32
      scf.if %38 {
        %cst_30 = arith.constant 0.000000e+00 : f32
        %50 = vector.broadcast %cst_30 : f32 to vector<8x1xf32>
        %c0_31 = arith.constant 0 : index
        %c0_32 = arith.constant 0 : index
        %51 = vector.load %arg12[%c0_31, %c0_32] : memref<8x1xf32, #tpu.memory_space<vmem>>, vector<8x1xf32>
        tpu.vector_store %arg12[%c0_31, %c0_32], %50 {strides = array<i32>} : memref<8x1xf32, #tpu.memory_space<vmem>>, vector<8x1xf32>,
        %cst_33 = arith.constant 0.000000e+00 : f32
        %52 = vector.broadcast %cst_33 : f32 to vector<8x1xf32>
        %c0_34 = arith.constant 0 : index
        %c0_35 = arith.constant 0 : index
        %53 = vector.load %arg13[%c0_34, %c0_35] : memref<8x1xf32, #tpu.memory_space<vmem>>, vector<8x1xf32>
        tpu.vector_store %arg13[%c0_34, %c0_35], %52 {strides = array<i32>} : memref<8x1xf32, #tpu.memory_space<vmem>>, vector<8x1xf32>,
      } else {
      }
      %c0_20 = arith.constant 0 : index
      %c0_21 = arith.constant 0 : index
      %39 = vector.load %arg12[%c0_20, %c0_21] : memref<8x1xf32, #tpu.memory_space<vmem>>, vector<8x1xf32>
      %cst_22 = arith.constant dense<0.000000e+00> : vector<8xf32>
      %40 = vector.multi_reduction <add>, %35, %cst_22 [1] : vector<8x512xf32> to vector<8xf32>
      %41 = vector.shape_cast %40 : vector<8xf32> to vector<8x1xf32>
      %42 = arith.addf %39, %41 : vector<8x1xf32>
      %c0_23 = arith.constant 0 : index
      %c0_24 = arith.constant 0 : index
      %43 = vector.load %arg12[%c0_23, %c0_24] : memref<8x1xf32, #tpu.memory_space<vmem>>, vector<8x1xf32>
      tpu.vector_store %arg12[%c0_23, %c0_24], %42 {strides = array<i32>} : memref<8x1xf32, #tpu.memory_space<vmem>>, vector<8x1xf32>,
      %c0_25 = arith.constant 0 : index
      %c0_26 = arith.constant 0 : index
      %44 = vector.load %arg13[%c0_25, %c0_26] : memref<8x1xf32, #tpu.memory_space<vmem>>, vector<8x1xf32>
      %45 = arith.mulf %35, %32 : vector<8x512xf32>
      %cst_27 = arith.constant dense<0.000000e+00> : vector<8xf32>
      %46 = vector.multi_reduction <add>, %45, %cst_27 [1] : vector<8x512xf32> to vector<8xf32>
      %47 = vector.shape_cast %46 : vector<8xf32> to vector<8x1xf32>
      %48 = arith.addf %44, %47 : vector<8x1xf32>
      %c0_28 = arith.constant 0 : index
      %c0_29 = arith.constant 0 : index
      %49 = vector.load %arg13[%c0_28, %c0_29] : memref<8x1xf32, #tpu.memory_space<vmem>>, vector<8x1xf32>
      tpu.vector_store %arg13[%c0_28, %c0_29], %48 {strides = array<i32>} : memref<8x1xf32, #tpu.memory_space<vmem>>, vector<8x1xf32>,
    } else {
    }
    %c1_i32 = arith.constant 1 : i32
    %3 = arith.cmpi eq, %arg0, %c1_i32 : i32
    %4 = arith.extui %3 : i1 to i32
    %c0_i32_1 = arith.constant 0 : i32
    %5 = arith.cmpi ne, %4, %c0_i32_1 : i32
    scf.if %5 {
      %c0_i32_2 = arith.constant 0 : i32
      %6 = arith.cmpi eq, %arg1, %c0_i32_2 : i32
      %7 = arith.extui %6 : i1 to i32
      %c0_i32_3 = arith.constant 0 : i32
      %8 = arith.cmpi ne, %7, %c0_i32_3 : i32
      scf.if %8 {
        %c0_24 = arith.constant 0 : index
        %c0_25 = arith.constant 0 : index
        %48 = vector.load %arg12[%c0_24, %c0_25] : memref<8x1xf32, #tpu.memory_space<vmem>>, vector<8x1xf32>
        %cst_26 = arith.constant 0.00154320989 : f32
        %49 = vector.broadcast %cst_26 : f32 to vector<8x1xf32>
        %50 = arith.mulf %48, %49 : vector<8x1xf32>
        %c0_27 = arith.constant 0 : index
        %c0_28 = arith.constant 0 : index
        %51 = vector.load %arg13[%c0_27, %c0_28] : memref<8x1xf32, #tpu.memory_space<vmem>>, vector<8x1xf32>
        %cst_29 = arith.constant 0.00154320989 : f32
        %52 = vector.broadcast %cst_29 : f32 to vector<8x1xf32>
        %53 = arith.mulf %51, %52 : vector<8x1xf32>
        %54 = arith.mulf %50, %50 : vector<8x1xf32>
        %55 = arith.subf %53, %54 : vector<8x1xf32>
        %cst_30 = arith.constant 0.000000e+00 : f32
        %56 = vector.broadcast %cst_30 : f32 to vector<8x1xf32>
        %57 = arith.maximumf %55, %56 : vector<8x1xf32>
        %c0_31 = arith.constant 0 : index
        %c0_32 = arith.constant 0 : index
        %58 = vector.load %arg12[%c0_31, %c0_32] : memref<8x1xf32, #tpu.memory_space<vmem>>, vector<8x1xf32>
        tpu.vector_store %arg12[%c0_31, %c0_32], %50 {strides = array<i32>} : memref<8x1xf32, #tpu.memory_space<vmem>>, vector<8x1xf32>,
        %cst_33 = arith.constant 9.99999974E-6 : f32
        %59 = vector.broadcast %cst_33 : f32 to vector<8x1xf32>
        %60 = arith.addf %57, %59 : vector<8x1xf32>
        %61 = math.rsqrt %60 : vector<8x1xf32>
        %c0_34 = arith.constant 0 : index
        %c0_35 = arith.constant 0 : index
        %62 = vector.load %arg13[%c0_34, %c0_35] : memref<8x1xf32, #tpu.memory_space<vmem>>, vector<8x1xf32>
        tpu.vector_store %arg13[%c0_34, %c0_35], %61 {strides = array<i32>} : memref<8x1xf32, #tpu.memory_space<vmem>>, vector<8x1xf32>,
      } else {
      }
      %9 = arith.index_cast %arg1 : i32 to index
      %c0 = arith.constant 0 : index
      %c0_4 = arith.constant 0 : index
      %10 = vector.load %arg11[%9, %c0, %c0_4] : memref<2x8x512xf32, #tpu.memory_space<vmem>>, vector<1x8x512xf32>
      %11 = vector.shape_cast %10 : vector<1x8x512xf32> to vector<8x512xf32>
      %c511_i32 = arith.constant 511 : i32
      %12 = tpu.dynamic_rotate %11 by %c511_i32 dim 1 : vector<8x512xf32>, i32 -> vector<8x512xf32>
      %c510_i32 = arith.constant 510 : i32
      %13 = tpu.dynamic_rotate %11 by %c510_i32 dim 1 : vector<8x512xf32>, i32 -> vector<8x512xf32>
      %c492_i32 = arith.constant 492 : i32
      %14 = tpu.dynamic_rotate %11 by %c492_i32 dim 1 : vector<8x512xf32>, i32 -> vector<8x512xf32>
      %c491_i32 = arith.constant 491 : i32
      %15 = tpu.dynamic_rotate %11 by %c491_i32 dim 1 : vector<8x512xf32>, i32 -> vector<8x512xf32>
      %c490_i32 = arith.constant 490 : i32
      %16 = tpu.dynamic_rotate %11 by %c490_i32 dim 1 : vector<8x512xf32>, i32 -> vector<8x512xf32>
      %c472_i32 = arith.constant 472 : i32
      %17 = tpu.dynamic_rotate %11 by %c472_i32 dim 1 : vector<8x512xf32>, i32 -> vector<8x512xf32>
      %c471_i32 = arith.constant 471 : i32
      %18 = tpu.dynamic_rotate %11 by %c471_i32 dim 1 : vector<8x512xf32>, i32 -> vector<8x512xf32>
      %c470_i32 = arith.constant 470 : i32
      %19 = tpu.dynamic_rotate %11 by %c470_i32 dim 1 : vector<8x512xf32>, i32 -> vector<8x512xf32>
      %20 = tpu.concatenate %11, %12, %13, %14, %15, %16, %17, %18, %19 in 0 : vector<8x512xf32>, vector<8x512xf32>, vector<8x512xf32>, vector<8x512xf32>, vector<8x512xf32>, vector<8x512xf32>, vector<8x512xf32>, vector<8x512xf32>, vector<8x512xf32> -> vector<72x512xf32>
      %c0_5 = arith.constant 0 : index
      %c0_6 = arith.constant 0 : index
      %21 = vector.load %arg5[%c0_5, %c0_6] : memref<8x72xf32, #tpu.memory_space<vmem>>, vector<8x72xf32>
      %cst = arith.constant dense<0.000000e+00> : vector<8x512xf32>
      %22 = tpu.matmul %21, %20, %cst {dimension_numbers = #tpu.dot_dimension_numbers<[1], [0], [0], [1], [0, 0, 1, 1], [], []>} : vector<8x72xf32>, vector<72x512xf32>, vector<8x512xf32> -> vector<8x512xf32>
      %c0_7 = arith.constant 0 : index
      %c0_8 = arith.constant 0 : index
      %23 = vector.load %arg12[%c0_7, %c0_8] : memref<8x1xf32, #tpu.memory_space<vmem>>, vector<8x1xf32>
      %24 = vector.broadcast %23 : vector<8x1xf32> to vector<8x512xf32>
      %25 = arith.subf %22, %24 : vector<8x512xf32>
      %c0_9 = arith.constant 0 : index
      %c0_10 = arith.constant 0 : index
      %26 = vector.load %arg13[%c0_9, %c0_10] : memref<8x1xf32, #tpu.memory_space<vmem>>, vector<8x1xf32>
      %27 = vector.broadcast %26 : vector<8x1xf32> to vector<8x512xf32>
      %28 = arith.mulf %25, %27 : vector<8x512xf32>
      %c0_11 = arith.constant 0 : index
      %c0_12 = arith.constant 0 : index
      %c0_13 = arith.constant 0 : index
      %29 = vector.load %arg6[%c0_11, %c0_12, %c0_13] : memref<1x8x1xf32, #tpu.memory_space<vmem>>, vector<1x8x1xf32>
      %30 = vector.shape_cast %29 : vector<1x8x1xf32> to vector<8x1xf32>
      %31 = vector.broadcast %30 : vector<8x1xf32> to vector<8x512xf32>
      %32 = arith.mulf %31, %28 : vector<8x512xf32>
      %c0_14 = arith.constant 0 : index
      %c0_15 = arith.constant 0 : index
      %c0_16 = arith.constant 0 : index
      %33 = vector.load %arg7[%c0_14, %c0_15, %c0_16] : memref<1x8x1xf32, #tpu.memory_space<vmem>>, vector<1x8x1xf32>
      %34 = vector.shape_cast %33 : vector<1x8x1xf32> to vector<8x1xf32>
      %35 = vector.broadcast %34 : vector<8x1xf32> to vector<8x512xf32>
      %36 = arith.addf %32, %35 : vector<8x512xf32>
      %c491_i32_17 = arith.constant 491 : i32
      %37 = tpu.dynamic_rotate %11 by %c491_i32_17 dim 1 : vector<8x512xf32>, i32 -> vector<8x512xf32>
      %cst_18 = arith.constant 0.000000e+00 : f32
      %38 = vector.broadcast %cst_18 : f32 to vector<8x512xf32>
      %39 = arith.maximumf %36, %38 : vector<8x512xf32>
      %40 = arith.addf %39, %37 : vector<8x512xf32>
      %c0_19 = arith.constant 0 : index
      %c0_20 = arith.constant 0 : index
      %41 = vector.load %arg9[%c0_19, %c0_20] : memref<1x512xf32, #tpu.memory_space<vmem>>, vector<1x512xf32>
      %42 = vector.broadcast %41 : vector<1x512xf32> to vector<8x512xf32>
      %43 = arith.mulf %40, %42 : vector<8x512xf32>
      %44 = vector.extract_strided_slice %43 {offsets = [0, 0], sizes = [4, 512], strides = [1, 1]} : vector<8x512xf32> to vector<4x512xf32>
      %c0_21 = arith.constant 0 : index
      %c0_22 = arith.constant 0 : index
      %c0_23 = arith.constant 0 : index
      %45 = vector.load %arg10[%c0_21, %c0_22, %c0_23] : memref<1x4x512xf32, #tpu.memory_space<vmem>>, vector<1x4x512xf32>
      %46 = vector.shape_cast %45 : vector<1x4x512xf32> to vector<4x512xf32>
      %47 = vector.shape_cast %44 : vector<4x512xf32> to vector<1x4x512xf32>
      tpu.vector_store %arg10[%c0_21, %c0_22, %c0_23], %47 {strides = array<i32>} : memref<1x4x512xf32, #tpu.memory_space<vmem>>, vector<1x4x512xf32>,
    } else {
    }
    return
  }
  func.func @transform_0(%arg0: i32, %arg1: i32) -> (i32, i32, i32) {
    %c1_i32 = arith.constant 1 : i32
    %0 = arith.subi %c1_i32, %arg0 : i32
    %1 = arith.muli %0, %arg1 : i32
    %c0_i32 = arith.constant 0 : i32
    %c0_i32_0 = arith.constant 0 : i32
    %c0_i32_1 = arith.constant 0 : i32
    return %1, %c0_i32, %c0_i32_0 : i32, i32, i32
  }
  func.func @transform_1(%arg0: i32, %arg1: i32) -> (i32, i32) {
    %c0_i32 = arith.constant 0 : i32
    %c0_i32_0 = arith.constant 0 : i32
    %c0_i32_1 = arith.constant 0 : i32
    return %c0_i32, %c0_i32_0 : i32, i32
  }
  func.func @transform_2(%arg0: i32, %arg1: i32) -> (i32, i32) {
    %c0_i32 = arith.constant 0 : i32
    %c0_i32_0 = arith.constant 0 : i32
    %c0_i32_1 = arith.constant 0 : i32
    return %c0_i32, %c0_i32_0 : i32, i32
  }
  func.func @transform_3(%arg0: i32, %arg1: i32) -> (i32, i32) {
    %c0_i32 = arith.constant 0 : i32
    %c0_i32_0 = arith.constant 0 : i32
    %c0_i32_1 = arith.constant 0 : i32
    return %c0_i32, %c0_i32_0 : i32, i32
  }
  func.func @transform_4(%arg0: i32, %arg1: i32) -> (i32, i32, i32) {
    %c0_i32 = arith.constant 0 : i32
    %c0_i32_0 = arith.constant 0 : i32
    %c0_i32_1 = arith.constant 0 : i32
    return %arg1, %c0_i32, %c0_i32_0 : i32, i32, i32
  }
  func.func @transform_5(%arg0: i32, %arg1: i32) -> (i32, i32, i32) {
    %c0_i32 = arith.constant 0 : i32
    %c0_i32_0 = arith.constant 0 : i32
    %c0_i32_1 = arith.constant 0 : i32
    return %arg1, %c0_i32, %c0_i32_0 : i32, i32, i32
  }
  func.func @transform_6(%arg0: i32, %arg1: i32) -> (i32, i32) {
    %c0_i32 = arith.constant 0 : i32
    %c0_i32_0 = arith.constant 0 : i32
    %c0_i32_1 = arith.constant 0 : i32
    return %c0_i32, %c0_i32_0 : i32, i32
  }
  func.func @transform_7(%arg0: i32, %arg1: i32) -> (i32, i32) {
    %c0_i32 = arith.constant 0 : i32
    %c0_i32_0 = arith.constant 0 : i32
    %c0_i32_1 = arith.constant 0 : i32
    return %c0_i32, %c0_i32_0 : i32, i32
  }
  func.func @transform_8(%arg0: i32, %arg1: i32) -> (i32, i32, i32) {
    %0 = arith.muli %arg0, %arg1 : i32
    %c0_i32 = arith.constant 0 : i32
    %c0_i32_0 = arith.constant 0 : i32
    %c0_i32_1 = arith.constant 0 : i32
    return %0, %c0_i32, %c0_i32_0 : i32, i32, i32
  }
}

</mosaic_0001>

<llo_original>
// kernel: resblock_forward.1
$region0: #{resblock_forward.1}
  #allocation0 [shape = 'u32[]', space=smem, size = 0x4, offset = 0x4, fixed_abs, tag = 'smem constant byte address 0x4 - core index']
  #allocation1 [shape = 'u32[144,128]{1,0:T(1,128)}', space=vmem, size = 0x12000, scoped, tag = 'internal scratch']
  #allocation2 [shape = 'f32[2,8,512]{2,1,0:T(8,128)}', space=vmem, size = 0x8000, scoped, tag = 'scratch operand']
  #allocation3 [shape = 'f32[8,1]{1,0:T(8,128)}', space=vmem, size = 0x1000, scoped, tag = 'scratch operand']
  #allocation4 [shape = 'f32[8,1]{1,0:T(8,128)}', space=vmem, size = 0x1000, scoped, tag = 'scratch operand']
  %s0 = inlined_call_operand.vmem [shape: f32[2,4,512], index: 0, kind: input, shape index: {}]
  %s1 = inlined_call_operand.vmem [shape: f32[8,4], index: 1, kind: input, shape index: {}]
  %s2 = inlined_call_operand.vmem [shape: f32[8,1], index: 2, kind: input, shape index: {}]
  %s3 = inlined_call_operand.vmem [shape: f32[8,72], index: 3, kind: input, shape index: {}]
  %s4 = inlined_call_operand.vmem [shape: f32[2,8,1], index: 4, kind: input, shape index: {}]
  %s5 = inlined_call_operand.vmem [shape: f32[2,8,1], index: 5, kind: input, shape index: {}]
  %s6 = inlined_call_operand.vmem [shape: f32[1,512], index: 6, kind: input, shape index: {}]
  %s7 = inlined_call_operand.vmem [shape: f32[1,512], index: 7, kind: input, shape index: {}]
  %s8 = inlined_call_operand.vmem [shape: f32[2,4,512], index: 8, kind: output, shape index: {}]
  %s9 = sld [smem:[#allocation0]]
  $region81: #{resblock_forward.1} parent=0
    _
  %s11 = ssub.s32 1, %s9
  %s12 = scalar_select 0, %s11, %s9
  loop: start=0, step=1, limit=6
  $region2: #{resblock_forward.1} parent=0 // loop_pre_header
    _
  $region3: #{resblock_forward.1} parent=0 // loop_header
    %s14 = sphi 0, %s18
    %p15 = scmp.ge.s32.totalorder %s14, 6
    %s21 = sphi 0, %s33
    %s22 = sphi 0, %s29
    %s23 = sphi 0, %s21
    %s24 = sphi 0, %s22
    %s25 = sphi 0, %s23
    %s26 = sphi 0, %s24
    %s40 = sphi 0, %s42
    %s43 = sphi 0, %s40
    %s44 = sphi 0, %s43
    %s60 = sphi 0, %s44
    %s64 = sphi 0, %s64
    %s66 = sphi 0, %s64
    %s67 = sphi 0, %s66
    %s81 = sphi 0, %s67
    %s85 = sphi 0, %s85
    %s87 = sphi 0, %s85
    %s88 = sphi 0, %s87
    %s102 = sphi 0, %s88
    %s106 = sphi 0, %s106
    %s108 = sphi 0, %s106
    %s109 = sphi 0, %s108
    %s123 = sphi 0, %s109
    %s129 = sphi 0, %s131
    %s132 = sphi 0, %s129
    %s133 = sphi 0, %s132
    %s149 = sphi 0, %s133
    %s155 = sphi 0, %s157
    %s158 = sphi 0, %s155
    %s159 = sphi 0, %s158
    %s175 = sphi 0, %s159
    %s179 = sphi 0, %s179
    %s181 = sphi 0, %s179
    %s182 = sphi 0, %s181
    %s196 = sphi 0, %s182
    %s200 = sphi 0, %s200
    %s202 = sphi 0, %s200
    %s203 = sphi 0, %s202
    %s217 = sphi 0, %s203
    %s225 = sphi 0, %s227
    %s228 = sphi 0, %s225
    %s229 = sphi 0, %s228
    %s245 = sphi 0, %s229
  $region4: #{resblock_forward.1} parent=0 // loop_header_branch
    %17 = sbr.rel (%p15) target = $region8
  $region5: #{resblock_forward.1} parent=0 // loop_body
    %s19 = ssub.s32 %s14, 1
    %s20 = ssub.s32 %s14, 2
    %s27 = sadd.s32 1, %s22
    %p28 = scmp.ge.s32.totalorder %s27, 2
    %s29 = scalar_select %p28, 0, %s27
    %s30 = sadd.s32 1, %s21
    %s31 = scalar_select %p28, %s30, %s21
    %p32 = scmp.ge.s32.totalorder %s31, 2
    %s33 = scalar_select %p32, 0, %s31
    %s34 = ssub.s32 1, %s21
    %s35 = smul.u32 %s34, %s22
    %s36 = ssub.s32 1, %s33
    %s37 = smul.u32 %s36, %s29
    %s38 = ssub.s32 %s35, %s37
    %p39 = scmp.eq.s32.totalorder %s38, 0
    %s41 = sadd.s32 %s40, 1
    %s42 = scalar_select %p39, %s40, %s41
    %p45 = pneg %p39
    %p46 = scmp.eq.s32.totalorder %s14, 3
    %p47 = por %p45, %p46
    %p48 = scmp.ne.s32.totalorder %s40, %s43
    %p49 = scmp.eq.s32.totalorder %s14, 0
    %p50 = por %p48, %p49
    %p51 = scmp.ne.s32.totalorder %s40, %s43
    %p52 = scmp.eq.s32.totalorder %s19, 3
    %p53 = por %p51, %p52
    %p54 = scmp.ne.s32.totalorder %s43, %s44
    %p55 = scmp.eq.s32.totalorder %s19, 0
    %p56 = por %p54, %p55
    %p57 = scmp.ne.s32.totalorder %s43, %s44
    %p58 = scmp.eq.s32.totalorder %s20, 3
    %p59 = por %p57, %p58
    %p61 = scmp.ne.s32.totalorder %s44, %s60
    %p62 = scmp.eq.s32.totalorder %s20, 0
    %p63 = por %p61, %p62
    %s65 = sadd.s32 %s64, 1
    %p68 = scmp.eq.s32.totalorder %s14, 3
    %p69 = scmp.ne.s32.totalorder %s64, %s66
    %p70 = scmp.eq.s32.totalorder %s14, 0
    %p71 = por %p69, %p70
    %p72 = scmp.ne.s32.totalorder %s64, %s66
    %p73 = scmp.eq.s32.totalorder %s19, 3
    %p74 = por %p72, %p73
    %p75 = scmp.ne.s32.totalorder %s66, %s67
    %p76 = scmp.eq.s32.totalorder %s19, 0
    %p77 = por %p75, %p76
    %p78 = scmp.ne.s32.totalorder %s66, %s67
    %p79 = scmp.eq.s32.totalorder %s20, 3
    %p80 = por %p78, %p79
    %p82 = scmp.ne.s32.totalorder %s67, %s81
    %p83 = scmp.eq.s32.totalorder %s20, 0
    %p84 = por %p82, %p83
    %s86 = sadd.s32 %s85, 1
    %p89 = scmp.eq.s32.totalorder %s14, 3
    %p90 = scmp.ne.s32.totalorder %s85, %s87
    %p91 = scmp.eq.s32.totalorder %s14, 0
    %p92 = por %p90, %p91
    %p93 = scmp.ne.s32.totalorder %s85, %s87
    %p94 = scmp.eq.s32.totalorder %s19, 3
    %p95 = por %p93, %p94
    %p96 = scmp.ne.s32.totalorder %s87, %s88
    %p97 = scmp.eq.s32.totalorder %s19, 0
    %p98 = por %p96, %p97
    %p99 = scmp.ne.s32.totalorder %s87, %s88
    %p100 = scmp.eq.s32.totalorder %s20, 3
    %p101 = por %p99, %p100
    %p103 = scmp.ne.s32.totalorder %s88, %s102
    %p104 = scmp.eq.s32.totalorder %s20, 0
    %p105 = por %p103, %p104
    %s107 = sadd.s32 %s106, 1
    %p110 = scmp.eq.s32.totalorder %s14, 3
    %p111 = scmp.ne.s32.totalorder %s106, %s108
    %p112 = scmp.eq.s32.totalorder %s14, 0
    %p113 = por %p111, %p112
    %p114 = scmp.ne.s32.totalorder %s106, %s108
    %p115 = scmp.eq.s32.totalorder %s19, 3
    %p116 = por %p114, %p115
    %p117 = scmp.ne.s32.totalorder %s108, %s109
    %p118 = scmp.eq.s32.totalorder %s19, 0
    %p119 = por %p117, %p118
    %p120 = scmp.ne.s32.totalorder %s108, %s109
    %p121 = scmp.eq.s32.totalorder %s20, 3
    %p122 = por %p120, %p121
    %p124 = scmp.ne.s32.totalorder %s109, %s123
    %p125 = scmp.eq.s32.totalorder %s20, 0
    %p126 = por %p124, %p125
    %s127 = ssub.s32 %s22, %s29
    %p128 = scmp.eq.s32.totalorder %s127, 0
    %s130 = sadd.s32 %s129, 1
    %s131 = scalar_select %p128, %s129, %s130
    %p134 = pneg %p128
    %p135 = scmp.eq.s32.totalorder %s14, 3
    %p136 = por %p134, %p135
    %p137 = scmp.ne.s32.totalorder %s129, %s132
    %p138 = scmp.eq.s32.totalorder %s14, 0
    %p139 = por %p137, %p138
    %p140 = scmp.ne.s32.totalorder %s129, %s132
    %p141 = scmp.eq.s32.totalorder %s19, 3
    %p142 = por %p140, %p141
    %p143 = scmp.ne.s32.totalorder %s132, %s133
    %p144 = scmp.eq.s32.totalorder %s19, 0
    %p145 = por %p143, %p144
    %p146 = scmp.ne.s32.totalorder %s132, %s133
    %p147 = scmp.eq.s32.totalorder %s20, 3
    %p148 = por %p146, %p147
    %p150 = scmp.ne.s32.totalorder %s133, %s149
    %p151 = scmp.eq.s32.totalorder %s20, 0
    %p152 = por %p150, %p151
    %s153 = ssub.s32 %s22, %s29
    %p154 = scmp.eq.s32.totalorder %s153, 0
    %s156 = sadd.s32 %s155, 1
    %s157 = scalar_select %p154, %s155, %s156
    %p160 = pneg %p154
    %p161 = scmp.eq.s32.totalorder %s14, 3
    %p162 = por %p160, %p161
    %p163 = scmp.ne.s32.totalorder %s155, %s158
    %p164 = scmp.eq.s32.totalorder %s14, 0
    %p165 = por %p163, %p164
    %p166 = scmp.ne.s32.totalorder %s155, %s158
    %p167 = scmp.eq.s32.totalorder %s19, 3
    %p168 = por %p166, %p167
    %p169 = scmp.ne.s32.totalorder %s158, %s159
    %p170 = scmp.eq.s32.totalorder %s19, 0
    %p171 = por %p169, %p170
    %p172 = scmp.ne.s32.totalorder %s158, %s159
    %p173 = scmp.eq.s32.totalorder %s20, 3
    %p174 = por %p172, %p173
    %p176 = scmp.ne.s32.totalorder %s159, %s175
    %p177 = scmp.eq.s32.totalorder %s20, 0
    %p178 = por %p176, %p177
    %s180 = sadd.s32 %s179, 1
    %p183 = scmp.eq.s32.totalorder %s14, 3
    %p184 = scmp.ne.s32.totalorder %s179, %s181
    %p185 = scmp.eq.s32.totalorder %s14, 0
    %p186 = por %p184, %p185
    %p187 = scmp.ne.s32.totalorder %s179, %s181
    %p188 = scmp.eq.s32.totalorder %s19, 3
    %p189 = por %p187, %p188
    %p190 = scmp.ne.s32.totalorder %s181, %s182
    %p191 = scmp.eq.s32.totalorder %s19, 0
    %p192 = por %p190, %p191
    %p193 = scmp.ne.s32.totalorder %s181, %s182
    %p194 = scmp.eq.s32.totalorder %s20, 3
    %p195 = por %p193, %p194
    %p197 = scmp.ne.s32.totalorder %s182, %s196
    %p198 = scmp.eq.s32.totalorder %s20, 0
    %p199 = por %p197, %p198
    %s201 = sadd.s32 %s200, 1
    %p204 = scmp.eq.s32.totalorder %s14, 3
    %p205 = scmp.ne.s32.totalorder %s200, %s202
    %p206 = scmp.eq.s32.totalorder %s14, 0
    %p207 = por %p205, %p206
    %p208 = scmp.ne.s32.totalorder %s200, %s202
    %p209 = scmp.eq.s32.totalorder %s19, 3
    %p210 = por %p208, %p209
    %p211 = scmp.ne.s32.totalorder %s202, %s203
    %p212 = scmp.eq.s32.totalorder %s19, 0
    %p213 = por %p211, %p212
    %p214 = scmp.ne.s32.totalorder %s202, %s203
    %p215 = scmp.eq.s32.totalorder %s20, 3
    %p216 = por %p214, %p215
    %p218 = scmp.ne.s32.totalorder %s203, %s217
    %p219 = scmp.eq.s32.totalorder %s20, 0
    %p220 = por %p218, %p219
    %s221 = smul.u32 %s21, %s22
    %s222 = smul.u32 %s33, %s29
    %s223 = ssub.s32 %s221, %s222
    %p224 = scmp.eq.s32.totalorder %s223, 0
    %s226 = sadd.s32 %s225, 1
    %s227 = scalar_select %p224, %s225, %s226
    %p230 = pneg %p224
    %p231 = scmp.eq.s32.totalorder %s14, 3
    %p232 = por %p230, %p231
    %p233 = scmp.ne.s32.totalorder %s225, %s228
    %p234 = scmp.eq.s32.totalorder %s14, 0
    %p235 = por %p233, %p234
    %p236 = scmp.ne.s32.totalorder %s225, %s228
    %p237 = scmp.eq.s32.totalorder %s19, 3
    %p238 = por %p236, %p237
    %p239 = scmp.ne.s32.totalorder %s228, %s229
    %p240 = scmp.eq.s32.totalorder %s19, 0
    %p241 = por %p239, %p240
    %p242 = scmp.ne.s32.totalorder %s228, %s229
    %p243 = scmp.eq.s32.totalorder %s20, 3
    %p244 = por %p242, %p243
    %p246 = scmp.ne.s32.totalorder %s229, %s245
    %p247 = scmp.eq.s32.totalorder %s20, 0
    %p248 = por %p246, %p247
    %p249 = scmp.le.s32.totalorder 1, %s14
    %p250 = scmp.lt.s32.totalorder %s14, 5
    %p251 = pnand %p249, %p250
    %p252 = pneg %p251
    // Predicated region
    $region9: #{resblock_forward.1} parent=5 // pred_check
      _
    $region10: #{resblock_forward.1} parent=5 // pred_check_branch
      %254 = sbr.rel (%p251) target = $region12
    $region11: #{resblock_forward.1} parent=5 // pred_region
      %s255 = ssub.s32 %s14, 1
      // Predicated region
      $region13: #{resblock_forward.1} parent=11 // pred_check
        %p256 = pneg %p77
      $region14: #{resblock_forward.1} parent=11 // pred_check_branch
        %258 = sbr.rel (%p256) target = $region16
      $region15: #{resblock_forward.1} parent=11 // pred_region
        _
      $region16: #{resblock_forward.1} parent=11 // pred_fallthru
        _
      // Predicated region
      $region17: #{resblock_forward.1} parent=11 // pred_check
        %p259 = pneg %p98
      $region18: #{resblock_forward.1} parent=11 // pred_check_branch
        %261 = sbr.rel (%p259) target = $region20
      $region19: #{resblock_forward.1} parent=11 // pred_region
        _
      $region20: #{resblock_forward.1} parent=11 // pred_fallthru
        _
      // Predicated region
      $region21: #{resblock_forward.1} parent=11 // pred_check
        %p262 = pneg %p119
      $region22: #{resblock_forward.1} parent=11 // pred_check_branch
        %264 = sbr.rel (%p262) target = $region24
      $region23: #{resblock_forward.1} parent=11 // pred_region
        _
      $region24: #{resblock_forward.1} parent=11 // pred_fallthru
        _
      // Predicated region
      $region25: #{resblock_forward.1} parent=11 // pred_check
        %p265 = pneg %p192
      $region26: #{resblock_forward.1} parent=11 // pred_check_branch
        %267 = sbr.rel (%p265) target = $region28
      $region27: #{resblock_forward.1} parent=11 // pred_region
        _
      $region28: #{resblock_forward.1} parent=11 // pred_fallthru
        _
      // Predicated region
      $region29: #{resblock_forward.1} parent=11 // pred_check
        %p268 = pneg %p213
      $region30: #{resblock_forward.1} parent=11 // pred_check_branch
        %270 = sbr.rel (%p268) target = $region32
      $region31: #{resblock_forward.1} parent=11 // pred_region
        _
      $region32: #{resblock_forward.1} parent=11 // pred_fallthru
        _
    $region12: #{resblock_forward.1} parent=5 // pred_fallthru
      _
    %p271 = scmp.lt.s32.totalorder %s14, 4
    // Predicated region
    $region33: #{resblock_forward.1} parent=5 // pred_check
      %p272 = pneg %p271
    $region34: #{resblock_forward.1} parent=5 // pred_check_branch
      %274 = sbr.rel (%p272) target = $region36
    $region35: #{resblock_forward.1} parent=5 // pred_region
      // Predicated region
      $region37: #{resblock_forward.1} parent=35 // pred_check
        %p275 = pneg %p50
      $region38: #{resblock_forward.1} parent=35 // pred_check_branch
        %277 = sbr.rel (%p275) target = $region40
      $region39: #{resblock_forward.1} parent=35 // pred_region
        %s278 = ssub.s32 1, %s21
        %s279 = smul.u32 %s278, %s22
        %p280 = scmp.lt.s32.totalorder %s279, 1
        %s281 = scalar_select %p280, %s279, 1
        %s282 = smul.addr %s281, 4
        %s283 = smul.addr %s282, 4
        %s284 = scalar_lea.vmem %s0, %s283
        %s285 = ssub.s32 1, %s21
        %s286 = smul.u32 %s285, %s22
      $region40: #{resblock_forward.1} parent=35 // pred_fallthru
        _
      // Predicated region
      $region41: #{resblock_forward.1} parent=35 // pred_check
        %p287 = pneg %p139
      $region42: #{resblock_forward.1} parent=35 // pred_check_branch
        %289 = sbr.rel (%p287) target = $region44
      $region43: #{resblock_forward.1} parent=35 // pred_region
        %p290 = scmp.lt.s32.totalorder %s22, 1
        %s291 = scalar_select %p290, %s22, 1
        %s292 = smul.addr %s291, 8
        %s293 = scalar_lea.vmem %s4, %s292
      $region44: #{resblock_forward.1} parent=35 // pred_fallthru
        _
      // Predicated region
      $region45: #{resblock_forward.1} parent=35 // pred_check
        %p294 = pneg %p165
      $region46: #{resblock_forward.1} parent=35 // pred_check_branch
        %296 = sbr.rel (%p294) target = $region48
      $region47: #{resblock_forward.1} parent=35 // pred_region
        %p297 = scmp.lt.s32.totalorder %s22, 1
        %s298 = scalar_select %p297, %s22, 1
        %s299 = smul.addr %s298, 8
        %s300 = scalar_lea.vmem %s5, %s299
      $region48: #{resblock_forward.1} parent=35 // pred_fallthru
        _
    $region36: #{resblock_forward.1} parent=5 // pred_fallthru
      _
    %p301 = scmp.le.s32.totalorder 1, %s14
    %p302 = scmp.lt.s32.totalorder %s14, 5
    %p303 = pnand %p301, %p302
    %p304 = pneg %p303
    // Predicated region
    $region49: #{resblock_forward.1} parent=5 // pred_check
      _
    $region50: #{resblock_forward.1} parent=5 // pred_check_branch
      %306 = sbr.rel (%p303) target = $region52
    $region51: #{resblock_forward.1} parent=5 // pred_region
      %s307 = ssub.s32 %s14, 1
      %s308 = ssub.s32 1, %s23
      %s309 = smul.u32 %s308, %s24
      %p310 = scmp.lt.s32.totalorder %s309, 1
      %s311 = scalar_select %p310, %s309, 1
      %s312 = smul.addr %s311, 4
      %s313 = smul.addr %s312, 4
      %s314 = scalar_lea.vmem %s0, %s313
      %p315 = pneg %p56
      %p316 = pneg %p53
      %p317 = pneg %p77
      %p318 = pneg %p74
      %p319 = pneg %p98
      %p320 = pneg %p95
      %p321 = pneg %p119
      %p322 = pneg %p116
      %p323 = scmp.lt.s32.totalorder %s24, 1
      %s324 = scalar_select %p323, %s24, 1
      %s325 = smul.addr %s324, 8
      %s326 = scalar_lea.vmem %s4, %s325
      %p327 = pneg %p145
      %p328 = pneg %p142
      %p329 = scmp.lt.s32.totalorder %s24, 1
      %s330 = scalar_select %p329, %s24, 1
      %s331 = smul.addr %s330, 8
      %s332 = scalar_lea.vmem %s5, %s331
      %p333 = pneg %p171
      %p334 = pneg %p168
      %p335 = pneg %p192
      %p336 = pneg %p189
      %p337 = pneg %p213
      %p338 = pneg %p210
      %p339 = pneg %p241
      %p340 = pneg %p238
      %s341 = smul.u32 %s23, %s24
      %p342 = scmp.lt.s32.totalorder %s341, 1
      %s343 = scalar_select %p342, %s341, 1
      %s344 = smul.addr %s343, 4
      %s345 = smul.addr %s344, 4
      %s346 = scalar_lea.vmem %s8, %s345
      %s347 = ssub.s32 1, %s23
      %s348 = smul.u32 %s347, %s24
      %p349 = scmp.lt.s32.totalorder %s348, 1
      %s350 = scalar_select %p349, %s348, 1
      %s351 = smul.addr %s350, 4
      %s352 = smul.addr %s351, 4
      %s353 = scalar_lea.vmem %s0, %s352
      %s354 = ssub.s32 1, %s23
      %s355 = smul.u32 %s354, %s24
      %p356 = scmp.lt.s32.totalorder %s24, 1
      %s357 = scalar_select %p356, %s24, 1
      %s358 = smul.addr %s357, 8
      %s359 = scalar_lea.vmem %s4, %s358
      %p360 = scmp.lt.s32.totalorder %s24, 1
      %s361 = scalar_select %p360, %s24, 1
      %s362 = smul.addr %s361, 8
      %s363 = scalar_lea.vmem %s5, %s362
      %s364 = smul.u32 %s23, %s24
      %p365 = scmp.lt.s32.totalorder %s364, 1
      %s366 = scalar_select %p365, %s364, 1
      %s367 = smul.addr %s366, 4
      %s368 = smul.addr %s367, 4
      %s369 = scalar_lea.vmem %s8, %s368
      %s370 = smul.u32 %s23, %s24
      %p371 = scmp.eq.s32.totalorder %s23, 0
      // Predicated region
      $region53: #{resblock_forward.1} parent=51 // pred_check
        %p372 = pneg %p371
      $region54: #{resblock_forward.1} parent=51 // pred_check_branch
        %374 = sbr.rel (%p372) target = $region56
      $region55: #{resblock_forward.1} parent=51 // pred_region
        %v375 = vld [vmem:[%s1] sm:$0xff]
        %v376 = vld [vmem:[%s353] sm:$0xff]
        %v377 = vld [vmem:[%s353 + $0x8] sm:$0xff]
        %v378 = vld [vmem:[%s2] sm:$0xff]
        %380 = vset.pattern.permute.xlu0 0
        %381 = vperm.xlu0 %380, %v378
        %v382 = vpop.permute.xlu0 %381
        %v386 = vcombine.high %v376, %v376
        %v387 = vcombine.high %v377, %v377
        %vm388 = vcmask 31744
        %v390 = vsel %vm388, %v375, 0
        %vm392 = vcmask 1043456
        %v393 = vsel %vm392, %v376, 0
        %v395 = vsel %vm392, %v386, 0
        %v397 = vsel %vm392, %v377, 0
        %v399 = vsel %vm392, %v387, 0
        %401 = vmatprep.subr.mxu0 0.0
        %402 = vmatpush1.msra.mxu0 0.0
        %403 = vmatprep.subr.mxu0 0.0
        %404 = vmatpush1.msra.mxu0 0.0
        %405 = vmatprep.subr.mxu0 0.0
        %406 = vmatpush1.msra.mxu0 0.0
        %407 = vmatprep.subr.mxu0 0.0
        %408 = vmatpush1.msra.mxu0 0.0
        %409 = vmatprep.subr.mxu0 0.0
        %410 = vmatpush1.msra.mxu0 0.0
        %411 = vmatprep.subr.mxu0 0.0
        %412 = vmatpush1.msra.mxu0 0.0
        %413 = vmatprep.subr.mxu0 0.0
        %414 = vmatpush1.msra.mxu0 0.0
        %415 = vmatprep.subr.mxu0 0.0
        %416 = vmatpush1.msra.mxu0 0.0
        %417 = vmatprep.subr.mxu0 0.0
        %418 = vmatpush1.msra.mxu0 0.0
        %419 = vmatprep.subr.mxu0 0.0
        %420 = vmatpush1.msra.mxu0 0.0
        %421 = vmatprep.subr.mxu0 0.0
        %422 = vmatpush1.msra.mxu0 0.0
        %423 = vmatprep.subr.mxu0 0.0
        %424 = vmatpush1.msra.mxu0 0.0
        %425 = vmatprep.subr.mxu0 0.0
        %426 = vmatpush1.msra.mxu0 0.0
        %427 = vmatprep.subr.mxu0 0.0
        %428 = vmatpush1.msra.mxu0 0.0
        %429 = vmatprep.subr.mxu0 0.0
        %430 = vmatpush1.msra.mxu0 0.0
        %431 = vmatprep.subr.mxu0 %v395
        %432 = vmatpush1.msra.mxu0 %v393
        %433 = vmatprep.subr.mxu0 0.0
        %434 = vmatpush2.msra.mxu0 0.0
        %435 = vmatprep.subr.mxu0 0.0
        %436 = vmatpush2.msra.mxu0 0.0
        %437 = vmatprep.subr.mxu0 0.0
        %438 = vmatpush2.msra.mxu0 0.0
        %439 = vmatprep.subr.mxu0 0.0
        %440 = vmatpush2.msra.mxu0 0.0
        %441 = vmatprep.subr.mxu0 0.0
        %442 = vmatpush2.msra.mxu0 0.0
        %443 = vmatprep.subr.mxu0 0.0
        %444 = vmatpush2.msra.mxu0 0.0
        %445 = vmatprep.subr.mxu0 0.0
        %446 = vmatpush2.msra.mxu0 0.0
        %447 = vmatprep.subr.mxu0 0.0
        %448 = vmatpush2.msra.mxu0 0.0
        %449 = vmatprep.subr.mxu0 0.0
        %450 = vmatpush2.msra.mxu0 0.0
        %451 = vmatprep.subr.mxu0 0.0
        %452 = vmatpush2.msra.mxu0 0.0
        %453 = vmatprep.subr.mxu0 0.0
        %454 = vmatpush2.msra.mxu0 0.0
        %455 = vmatprep.subr.mxu0 0.0
        %456 = vmatpush2.msra.mxu0 0.0
        %457 = vmatprep.subr.mxu0 0.0
        %458 = vmatpush2.msra.mxu0 0.0
        %459 = vmatprep.subr.mxu0 0.0
        %460 = vmatpush2.msra.mxu0 0.0
        %461 = vmatprep.subr.mxu0 0.0
        %462 = vmatpush2.msra.mxu0 0.0
        %463 = vmatprep.subr.mxu0 0.0
        %464 = vmatpush2.msra.mxu0 0.0
        %465 = vmatprep.mubr.f32.mxu0 0.0
        %466 = vmatmul.mubr.f32.gmra.mxu0 %v390
        %v467 = vpop.f32.mrf.mxu0
        %v468 = vadd.f32 %v382, %v467
        %v469 = vpop.f32.mrf.mxu0
        %v470 = vadd.f32 %v382, %v469
        %471 = vdwg.mxu0
        %472 = vmatprep.subr.mxu0 0.0
        %473 = vmatpush1.msra.mxu0 0.0
        %474 = vmatprep.subr.mxu0 0.0
        %475 = vmatpush1.msra.mxu0 0.0
        %476 = vmatprep.subr.mxu0 0.0
        %477 = vmatpush1.msra.mxu0 0.0
        %478 = vmatprep.subr.mxu0 0.0
        %479 = vmatpush1.msra.mxu0 0.0
        %480 = vmatprep.subr.mxu0 0.0
        %481 = vmatpush1.msra.mxu0 0.0
        %482 = vmatprep.subr.mxu0 0.0
        %483 = vmatpush1.msra.mxu0 0.0
        %484 = vmatprep.subr.mxu0 0.0
        %485 = vmatpush1.msra.mxu0 0.0
        %486 = vmatprep.subr.mxu0 0.0
        %487 = vmatpush1.msra.mxu0 0.0
        %488 = vmatprep.subr.mxu0 0.0
        %489 = vmatpush1.msra.mxu0 0.0
        %490 = vmatprep.subr.mxu0 0.0
        %491 = vmatpush1.msra.mxu0 0.0
        %492 = vmatprep.subr.mxu0 0.0
        %493 = vmatpush1.msra.mxu0 0.0
        %494 = vmatprep.subr.mxu0 0.0
        %495 = vmatpush1.msra.mxu0 0.0
        %496 = vmatprep.subr.mxu0 0.0
        %497 = vmatpush1.msra.mxu0 0.0
        %498 = vmatprep.subr.mxu0 0.0
        %499 = vmatpush1.msra.mxu0 0.0
        %500 = vmatprep.subr.mxu0 0.0
        %501 = vmatpush1.msra.mxu0 0.0
        %502 = vmatprep.subr.mxu0 %v399
        %503 = vmatpush1.msra.mxu0 %v397
        %504 = vmatprep.subr.mxu0 0.0
        %505 = vmatpush2.msra.mxu0 0.0
        %506 = vmatprep.subr.mxu0 0.0
        %507 = vmatpush2.msra.mxu0 0.0
        %508 = vmatprep.subr.mxu0 0.0
        %509 = vmatpush2.msra.mxu0 0.0
        %510 = vmatprep.subr.mxu0 0.0
        %511 = vmatpush2.msra.mxu0 0.0
        %512 = vmatprep.subr.mxu0 0.0
        %513 = vmatpush2.msra.mxu0 0.0
        %514 = vmatprep.subr.mxu0 0.0
        %515 = vmatpush2.msra.mxu0 0.0
        %516 = vmatprep.subr.mxu0 0.0
        %517 = vmatpush2.msra.mxu0 0.0
        %518 = vmatprep.subr.mxu0 0.0
        %519 = vmatpush2.msra.mxu0 0.0
        %520 = vmatprep.subr.mxu0 0.0
        %521 = vmatpush2.msra.mxu0 0.0
        %522 = vmatprep.subr.mxu0 0.0
        %523 = vmatpush2.msra.mxu0 0.0
        %524 = vmatprep.subr.mxu0 0.0
        %525 = vmatpush2.msra.mxu0 0.0
        %526 = vmatprep.subr.mxu0 0.0
        %527 = vmatpush2.msra.mxu0 0.0
        %528 = vmatprep.subr.mxu0 0.0
        %529 = vmatpush2.msra.mxu0 0.0
        %530 = vmatprep.subr.mxu0 0.0
        %531 = vmatpush2.msra.mxu0 0.0
        %532 = vmatprep.subr.mxu0 0.0
        %533 = vmatpush2.msra.mxu0 0.0
        %534 = vmatprep.subr.mxu0 0.0
        %535 = vmatpush2.msra.mxu0 0.0
        %536 = vmatprep.mubr.f32.mxu0 0.0
        %537 = vmatmul.mubr.f32.gmra.mxu0 %v390
        %v538 = vpop.f32.mrf.mxu0
        %v539 = vadd.f32 %v382, %v538
        %v540 = vpop.f32.mrf.mxu0
        %v541 = vadd.f32 %v382, %v540
        %542 = vdwg.mxu0
        %v543 = vmax.f32 %v468, 0.0
        %v544 = vmax.f32 %v470, 0.0
        %v545 = vmax.f32 %v539, 0.0
        %v546 = vmax.f32 %v541, 0.0
        %v547 = vld [vmem:[%s6] sm:$0xf]
        %v549 = vlaneseq
        %v550 = vshrl.u32 %v549, 7
        %v551 = vsub.s32 0, %v550
        %v552 = vrot.slane %v547, %v551
        %v553 = vlaneseq
        %v554 = vshrl.u32 %v553, 7
        %v555 = vsub.s32 1, %v554
        %v556 = vrot.slane %v547, %v555
        %v557 = vlaneseq
        %v558 = vshrl.u32 %v557, 7
        %v559 = vsub.s32 2, %v558
        %v560 = vrot.slane %v547, %v559
        %v561 = vlaneseq
        %v562 = vshrl.u32 %v561, 7
        %v563 = vsub.s32 3, %v562
        %v564 = vrot.slane %v547, %v563
        %v569 = vmul.f32 %v543, %v552
        %v570 = vmul.f32 %v544, %v556
        %v571 = vmul.f32 %v545, %v560
        %v572 = vmul.f32 %v546, %v564
        %s573 = smul.u32 %s24, 4
        %s574 = smul.addr %s573, 8
        %s575 = scalar_lea.vmem [#allocation2], %s574
        %576 = vst [vmem:[%s575] sm:$0xff] %v569
        %577 = vst [vmem:[%s575 + $0x8] sm:$0xff] %v570
        %578 = vst [vmem:[%s575 + $0x10] sm:$0xff] %v571
        %579 = vst [vmem:[%s575 + $0x18] sm:$0xff] %v572
        %580 = vrot.lane.b32.xlu0 %v569, 127
        %v581 = vpop.permute.xlu0 %580
        %582 = vrot.lane.b32.xlu0 %v570, 127
        %v583 = vpop.permute.xlu0 %582
        %584 = vrot.lane.b32.xlu0 %v571, 127
        %v585 = vpop.permute.xlu0 %584
        %586 = vrot.lane.b32.xlu0 %v572, 127
        %v587 = vpop.permute.xlu0 %586
        %v588 = vlaneseq
        %v589 = vand.u32 %v588, 127
        %vm590 = vcmp.lt.s32.totalorder %v589, 127
        %v591 = vsel %vm590, %v585, %v587
        %v592 = vsel %vm590, %v583, %v585
        %v593 = vsel %vm590, %v581, %v583
        %v594 = vsel %vm590, %v587, %v581
        %595 = vrot.lane.b32.xlu0 %v569, 126
        %v596 = vpop.permute.xlu0 %595
        %597 = vrot.lane.b32.xlu0 %v570, 126
        %v598 = vpop.permute.xlu0 %597
        %599 = vrot.lane.b32.xlu0 %v571, 126
        %v600 = vpop.permute.xlu0 %599
        %601 = vrot.lane.b32.xlu0 %v572, 126
        %v602 = vpop.permute.xlu0 %601
        %vm603 = vcmp.lt.s32.totalorder %v589, 126
        %v604 = vsel %vm603, %v600, %v602
        %v605 = vsel %vm603, %v598, %v600
        %v606 = vsel %vm603, %v596, %v598
        %v607 = vsel %vm603, %v602, %v596
        %608 = vrot.lane.b32.xlu0 %v569, 108
        %v609 = vpop.permute.xlu0 %608
        %610 = vrot.lane.b32.xlu0 %v570, 108
        %v611 = vpop.permute.xlu0 %610
        %612 = vrot.lane.b32.xlu0 %v571, 108
        %v613 = vpop.permute.xlu0 %612
        %614 = vrot.lane.b32.xlu0 %v572, 108
        %v615 = vpop.permute.xlu0 %614
        %vm616 = vcmp.lt.s32.totalorder %v589, 108
        %v617 = vsel %vm616, %v613, %v615
        %v618 = vsel %vm616, %v611, %v613
        %v619 = vsel %vm616, %v609, %v611
        %v620 = vsel %vm616, %v615, %v609
        %621 = vrot.lane.b32.xlu0 %v569, 107
        %v622 = vpop.permute.xlu0 %621
        %623 = vrot.lane.b32.xlu0 %v570, 107
        %v624 = vpop.permute.xlu0 %623
        %625 = vrot.lane.b32.xlu0 %v571, 107
        %v626 = vpop.permute.xlu0 %625
        %627 = vrot.lane.b32.xlu0 %v572, 107
        %v628 = vpop.permute.xlu0 %627
        %vm629 = vcmp.lt.s32.totalorder %v589, 107
        %v630 = vsel %vm629, %v626, %v628
        %v631 = vsel %vm629, %v624, %v626
        %v632 = vsel %vm629, %v622, %v624
        %v633 = vsel %vm629, %v628, %v622
        %634 = vrot.lane.b32.xlu0 %v569, 106
        %v635 = vpop.permute.xlu0 %634
        %636 = vrot.lane.b32.xlu0 %v570, 106
        %v637 = vpop.permute.xlu0 %636
        %638 = vrot.lane.b32.xlu0 %v571, 106
        %v639 = vpop.permute.xlu0 %638
        %640 = vrot.lane.b32.xlu0 %v572, 106
        %v641 = vpop.permute.xlu0 %640
        %vm642 = vcmp.lt.s32.totalorder %v589, 106
        %v643 = vsel %vm642, %v639, %v641
        %v644 = vsel %vm642, %v637, %v639
        %v645 = vsel %vm642, %v635, %v637
        %v646 = vsel %vm642, %v641, %v635
        %647 = vrot.lane.b32.xlu0 %v569, 88
        %v648 = vpop.permute.xlu0 %647
        %649 = vrot.lane.b32.xlu0 %v570, 88
        %v650 = vpop.permute.xlu0 %649
        %651 = vrot.lane.b32.xlu0 %v571, 88
        %v652 = vpop.permute.xlu0 %651
        %653 = vrot.lane.b32.xlu0 %v572, 88
        %v654 = vpop.permute.xlu0 %653
        %vm655 = vcmp.lt.s32.totalorder %v589, 88
        %v656 = vsel %vm655, %v652, %v654
        %v657 = vsel %vm655, %v650, %v652
        %v658 = vsel %vm655, %v648, %v650
        %v659 = vsel %vm655, %v654, %v648
        %660 = vrot.lane.b32.xlu0 %v569, 87
        %v661 = vpop.permute.xlu0 %660
        %662 = vrot.lane.b32.xlu0 %v570, 87
        %v663 = vpop.permute.xlu0 %662
        %664 = vrot.lane.b32.xlu0 %v571, 87
        %v665 = vpop.permute.xlu0 %664
        %666 = vrot.lane.b32.xlu0 %v572, 87
        %v667 = vpop.permute.xlu0 %666
        %vm668 = vcmp.lt.s32.totalorder %v589, 87
        %v669 = vsel %vm668, %v665, %v667
        %v670 = vsel %vm668, %v663, %v665
        %v671 = vsel %vm668, %v661, %v663
        %v672 = vsel %vm668, %v667, %v661
        %673 = vrot.lane.b32.xlu0 %v569, 86
        %v674 = vpop.permute.xlu0 %673
        %675 = vrot.lane.b32.xlu0 %v570, 86
        %v676 = vpop.permute.xlu0 %675
        %677 = vrot.lane.b32.xlu0 %v571, 86
        %v678 = vpop.permute.xlu0 %677
        %679 = vrot.lane.b32.xlu0 %v572, 86
        %v680 = vpop.permute.xlu0 %679
        %vm681 = vcmp.lt.s32.totalorder %v589, 86
        %v682 = vsel %vm681, %v678, %v680
        %v683 = vsel %vm681, %v676, %v678
        %v684 = vsel %vm681, %v674, %v676
        %v685 = vsel %vm681, %v680, %v674
        %v686 = vld [vmem:[%s3] sm:$0xff]
        %vm687 = vcmask 588800
        %v689 = vsel %vm687, %v686, 0
        %691 = vmatprep.subr.mxu0 0.0
        %692 = vmatpush1.msra.mxu0 0.0
        %693 = vmatprep.subr.mxu0 0.0
        %694 = vmatpush1.msra.mxu0 0.0
        %695 = vmatprep.subr.mxu0 0.0
        %696 = vmatpush1.msra.mxu0 0.0
        %697 = vmatprep.subr.mxu0 0.0
        %698 = vmatpush1.msra.mxu0 0.0
        %699 = vmatprep.subr.mxu0 0.0
        %700 = vmatpush1.msra.mxu0 0.0
        %701 = vmatprep.subr.mxu0 0.0
        %702 = vmatpush1.msra.mxu0 0.0
        %703 = vmatprep.subr.mxu0 0.0
        %704 = vmatpush1.msra.mxu0 0.0
        %705 = vmatprep.subr.mxu0 %v683
        %706 = vmatpush1.msra.mxu0 %v684
        %707 = vmatprep.subr.mxu0 %v670
        %708 = vmatpush1.msra.mxu0 %v671
        %709 = vmatprep.subr.mxu0 %v657
        %710 = vmatpush1.msra.mxu0 %v658
        %711 = vmatprep.subr.mxu0 %v644
        %712 = vmatpush1.msra.mxu0 %v645
        %713 = vmatprep.subr.mxu0 %v631
        %714 = vmatpush1.msra.mxu0 %v632
        %715 = vmatprep.subr.mxu0 %v618
        %716 = vmatpush1.msra.mxu0 %v619
        %717 = vmatprep.subr.mxu0 %v605
        %718 = vmatpush1.msra.mxu0 %v606
        %719 = vmatprep.subr.mxu0 %v592
        %720 = vmatpush1.msra.mxu0 %v593
        %721 = vmatprep.subr.mxu0 %v570
        %722 = vmatpush1.msra.mxu0 %v569
        %723 = vmatprep.subr.mxu0 0.0
        %724 = vmatpush2.msra.mxu0 0.0
        %725 = vmatprep.subr.mxu0 0.0
        %726 = vmatpush2.msra.mxu0 0.0
        %727 = vmatprep.subr.mxu0 0.0
        %728 = vmatpush2.msra.mxu0 0.0
        %729 = vmatprep.subr.mxu0 0.0
        %730 = vmatpush2.msra.mxu0 0.0
        %731 = vmatprep.subr.mxu0 0.0
        %732 = vmatpush2.msra.mxu0 0.0
        %733 = vmatprep.subr.mxu0 0.0
        %734 = vmatpush2.msra.mxu0 0.0
        %735 = vmatprep.subr.mxu0 0.0
        %736 = vmatpush2.msra.mxu0 0.0
        %737 = vmatprep.subr.mxu0 0.0
        %738 = vmatpush2.msra.mxu0 0.0
        %739 = vmatprep.subr.mxu0 0.0
        %740 = vmatpush2.msra.mxu0 0.0
        %741 = vmatprep.subr.mxu0 0.0
        %742 = vmatpush2.msra.mxu0 0.0
        %743 = vmatprep.subr.mxu0 0.0
        %744 = vmatpush2.msra.mxu0 0.0
        %745 = vmatprep.subr.mxu0 0.0
        %746 = vmatpush2.msra.mxu0 0.0
        %747 = vmatprep.subr.mxu0 0.0
        %748 = vmatpush2.msra.mxu0 0.0
        %749 = vmatprep.subr.mxu0 0.0
        %750 = vmatpush2.msra.mxu0 0.0
        %751 = vmatprep.subr.mxu0 0.0
        %752 = vmatpush2.msra.mxu0 0.0
        %753 = vmatprep.subr.mxu0 0.0
        %754 = vmatpush2.msra.mxu0 0.0
        %755 = vmatprep.mubr.f32.mxu0 0.0
        %756 = vmatmul.mubr.f32.gmra.mxu0 %v689
        %v757 = vpop.f32.mrf.mxu0
        %v758 = vadd.f32 0.0, %v757
        %v759 = vpop.f32.mrf.mxu0
        %v760 = vadd.f32 0.0, %v759
        %761 = vdwg.mxu0
        %762 = vmatprep.subr.mxu0 0.0
        %763 = vmatpush1.msra.mxu0 0.0
        %764 = vmatprep.subr.mxu0 0.0
        %765 = vmatpush1.msra.mxu0 0.0
        %766 = vmatprep.subr.mxu0 0.0
        %767 = vmatpush1.msra.mxu0 0.0
        %768 = vmatprep.subr.mxu0 0.0
        %769 = vmatpush1.msra.mxu0 0.0
        %770 = vmatprep.subr.mxu0 0.0
        %771 = vmatpush1.msra.mxu0 0.0
        %772 = vmatprep.subr.mxu0 0.0
        %773 = vmatpush1.msra.mxu0 0.0
        %774 = vmatprep.subr.mxu0 0.0
        %775 = vmatpush1.msra.mxu0 0.0
        %776 = vmatprep.subr.mxu0 %v685
        %777 = vmatpush1.msra.mxu0 %v682
        %778 = vmatprep.subr.mxu0 %v672
        %779 = vmatpush1.msra.mxu0 %v669
        %780 = vmatprep.subr.mxu0 %v659
        %781 = vmatpush1.msra.mxu0 %v656
        %782 = vmatprep.subr.mxu0 %v646
        %783 = vmatpush1.msra.mxu0 %v643
        %784 = vmatprep.subr.mxu0 %v633
        %785 = vmatpush1.msra.mxu0 %v630
        %786 = vmatprep.subr.mxu0 %v620
        %787 = vmatpush1.msra.mxu0 %v617
        %788 = vmatprep.subr.mxu0 %v607
        %789 = vmatpush1.msra.mxu0 %v604
        %790 = vmatprep.subr.mxu0 %v594
        %791 = vmatpush1.msra.mxu0 %v591
        %792 = vmatprep.subr.mxu0 %v572
        %793 = vmatpush1.msra.mxu0 %v571
        %794 = vmatprep.subr.mxu0 0.0
        %795 = vmatpush2.msra.mxu0 0.0
        %796 = vmatprep.subr.mxu0 0.0
        %797 = vmatpush2.msra.mxu0 0.0
        %798 = vmatprep.subr.mxu0 0.0
        %799 = vmatpush2.msra.mxu0 0.0
        %800 = vmatprep.subr.mxu0 0.0
        %801 = vmatpush2.msra.mxu0 0.0
        %802 = vmatprep.subr.mxu0 0.0
        %803 = vmatpush2.msra.mxu0 0.0
        %804 = vmatprep.subr.mxu0 0.0
        %805 = vmatpush2.msra.mxu0 0.0
        %806 = vmatprep.subr.mxu0 0.0
        %807 = vmatpush2.msra.mxu0 0.0
        %808 = vmatprep.subr.mxu0 0.0
        %809 = vmatpush2.msra.mxu0 0.0
        %810 = vmatprep.subr.mxu0 0.0
        %811 = vmatpush2.msra.mxu0 0.0
        %812 = vmatprep.subr.mxu0 0.0
        %813 = vmatpush2.msra.mxu0 0.0
        %814 = vmatprep.subr.mxu0 0.0
        %815 = vmatpush2.msra.mxu0 0.0
        %816 = vmatprep.subr.mxu0 0.0
        %817 = vmatpush2.msra.mxu0 0.0
        %818 = vmatprep.subr.mxu0 0.0
        %819 = vmatpush2.msra.mxu0 0.0
        %820 = vmatprep.subr.mxu0 0.0
        %821 = vmatpush2.msra.mxu0 0.0
        %822 = vmatprep.subr.mxu0 0.0
        %823 = vmatpush2.msra.mxu0 0.0
        %824 = vmatprep.subr.mxu0 0.0
        %825 = vmatpush2.msra.mxu0 0.0
        %826 = vmatprep.mubr.f32.mxu0 0.0
        %827 = vmatmul.mubr.f32.gmra.mxu0 %v689
        %v828 = vpop.f32.mrf.mxu0
        %v829 = vadd.f32 0.0, %v828
        %v830 = vpop.f32.mrf.mxu0
        %v831 = vadd.f32 0.0, %v830
        %832 = vdwg.mxu0
        %v833 = vld [vmem:[%s7] sm:$0xf]
        %v835 = vlaneseq
        %v836 = vshrl.u32 %v835, 7
        %v837 = vsub.s32 0, %v836
        %v838 = vrot.slane %v833, %v837
        %v839 = vlaneseq
        %v840 = vshrl.u32 %v839, 7
        %v841 = vsub.s32 1, %v840
        %v842 = vrot.slane %v833, %v841
        %v843 = vlaneseq
        %v844 = vshrl.u32 %v843, 7
        %v845 = vsub.s32 2, %v844
        %v846 = vrot.slane %v833, %v845
        %v847 = vlaneseq
        %v848 = vshrl.u32 %v847, 7
        %v849 = vsub.s32 3, %v848
        %v850 = vrot.slane %v833, %v849
        %v855 = vmul.f32 %v758, %v838
        %v856 = vmul.f32 %v760, %v842
        %v857 = vmul.f32 %v829, %v846
        %v858 = vmul.f32 %v831, %v850
        %p859 = scmp.eq.s32.totalorder %s24, 0
        // Predicated region
        $region57: #{resblock_forward.1} parent=55 // pred_check
          %p860 = pneg %p859
        $region58: #{resblock_forward.1} parent=55 // pred_check_branch
          %862 = sbr.rel (%p860) target = $region60
        $region59: #{resblock_forward.1} parent=55 // pred_region
          %vm863 = vcmask 7168
          %864 = vst.msk [vmem:[#allocation3] sm:$0xff] %vm863, 0.0
          %865 = vst.msk [vmem:[#allocation4] sm:$0xff] %vm863, 0.0
        $region60: #{resblock_forward.1} parent=55 // pred_fallthru
          _
        %v866 = vld [vmem:[#allocation3] sm:$0xff]
        %v867 = vadd.f32 %v855, %v856
        %v868 = vadd.f32 %v867, %v857
        %v869 = vadd.f32 %v868, %v858
        %870 = vadd.xlane.f32.xlu0 %v869
        %v871 = vpop.xlane.xlu0 %870
        %v872 = vadd.f32 %v866, %v871
        %vm873 = vcmask 7168
        %874 = vst.msk [vmem:[#allocation3] sm:$0xff] %vm873, %v872
        %v875 = vld [vmem:[#allocation4] sm:$0xff]
        %v876 = vmul.f32 %v855, %v758
        %v877 = vmul.f32 %v856, %v760
        %v878 = vmul.f32 %v857, %v829
        %v879 = vmul.f32 %v858, %v831
        %v880 = vadd.f32 %v876, %v877
        %v881 = vadd.f32 %v880, %v878
        %v882 = vadd.f32 %v881, %v879
        %883 = vadd.xlane.f32.xlu0 %v882
        %v884 = vpop.xlane.xlu0 %883
        %v885 = vadd.f32 %v875, %v884
        %886 = vst.msk [vmem:[#allocation4] sm:$0xff] %vm873, %v885
      $region56: #{resblock_forward.1} parent=51 // pred_fallthru
        _
      %p887 = scmp.eq.s32.totalorder %s23, 1
      // Predicated region
      $region61: #{resblock_forward.1} parent=51 // pred_check
        %p888 = pneg %p887
      $region62: #{resblock_forward.1} parent=51 // pred_check_branch
        %890 = sbr.rel (%p888) target = $region64
      $region63: #{resblock_forward.1} parent=51 // pred_region
        %p891 = scmp.eq.s32.totalorder %s24, 0
        // Predicated region
        $region65: #{resblock_forward.1} parent=63 // pred_check
          %p892 = pneg %p891
        $region66: #{resblock_forward.1} parent=63 // pred_check_branch
          %894 = sbr.rel (%p892) target = $region68
        $region67: #{resblock_forward.1} parent=63 // pred_region
          %v895 = vld [vmem:[#allocation3] sm:$0xff]
          %v896 = vmul.f32 %v895, 0.0015432099
          %v897 = vld [vmem:[#allocation4] sm:$0xff]
          %v898 = vmul.f32 %v897, 0.0015432099
          %v899 = vmul.f32 %v896, %v896
          %v900 = vsub.f32 %v898, %v899
          %v901 = vmax.f32 %v900, 0.0
          %vm902 = vcmask 7168
          %903 = vst.msk [vmem:[#allocation3] sm:$0xff] %vm902, %v896
          %v904 = vadd.f32 %v901, 1e-05
          %v905 = vrsqrt.pop %v904
          %906 = vst.msk [vmem:[#allocation4] sm:$0xff] %vm902, %v905
        $region68: #{resblock_forward.1} parent=63 // pred_fallthru
          _
        %s907 = smul.u32 %s24, 4
        %s908 = smul.addr %s907, 8
        %s909 = scalar_lea.vmem [#allocation2], %s908
        %v910 = vld [vmem:[%s909] sm:$0xff]
        %v911 = vld [vmem:[%s909 + $0x8] sm:$0xff]
        %v912 = vld [vmem:[%s909 + $0x10] sm:$0xff]
        %v913 = vld [vmem:[%s909 + $0x18] sm:$0xff]
        %914 = vrot.lane.b32.xlu0 %v910, 127
        %v915 = vpop.permute.xlu0 %914
        %916 = vrot.lane.b32.xlu0 %v911, 127
        %v917 = vpop.permute.xlu0 %916
        %918 = vrot.lane.b32.xlu0 %v912, 127
        %v919 = vpop.permute.xlu0 %918
        %920 = vrot.lane.b32.xlu0 %v913, 127
        %v921 = vpop.permute.xlu0 %920
        %v922 = vlaneseq
        %v923 = vand.u32 %v922, 127
        %vm924 = vcmp.lt.s32.totalorder %v923, 127
        %v925 = vsel %vm924, %v919, %v921
        %v926 = vsel %vm924, %v917, %v919
        %v927 = vsel %vm924, %v915, %v917
        %v928 = vsel %vm924, %v921, %v915
        %929 = vrot.lane.b32.xlu0 %v910, 126
        %v930 = vpop.permute.xlu0 %929
        %931 = vrot.lane.b32.xlu0 %v911, 126
        %v932 = vpop.permute.xlu0 %931
        %933 = vrot.lane.b32.xlu0 %v912, 126
        %v934 = vpop.permute.xlu0 %933
        %935 = vrot.lane.b32.xlu0 %v913, 126
        %v936 = vpop.permute.xlu0 %935
        %vm937 = vcmp.lt.s32.totalorder %v923, 126
        %v938 = vsel %vm937, %v934, %v936
        %v939 = vsel %vm937, %v932, %v934
        %v940 = vsel %vm937, %v930, %v932
        %v941 = vsel %vm937, %v936, %v930
        %942 = vrot.lane.b32.xlu0 %v910, 108
        %v943 = vpop.permute.xlu0 %942
        %944 = vrot.lane.b32.xlu0 %v911, 108
        %v945 = vpop.permute.xlu0 %944
        %946 = vrot.lane.b32.xlu0 %v912, 108
        %v947 = vpop.permute.xlu0 %946
        %948 = vrot.lane.b32.xlu0 %v913, 108
        %v949 = vpop.permute.xlu0 %948
        %vm950 = vcmp.lt.s32.totalorder %v923, 108
        %v951 = vsel %vm950, %v947, %v949
        %v952 = vsel %vm950, %v945, %v947
        %v953 = vsel %vm950, %v943, %v945
        %v954 = vsel %vm950, %v949, %v943
        %955 = vrot.lane.b32.xlu0 %v910, 107
        %v956 = vpop.permute.xlu0 %955
        %957 = vrot.lane.b32.xlu0 %v911, 107
        %v958 = vpop.permute.xlu0 %957
        %959 = vrot.lane.b32.xlu0 %v912, 107
        %v960 = vpop.permute.xlu0 %959
        %961 = vrot.lane.b32.xlu0 %v913, 107
        %v962 = vpop.permute.xlu0 %961
        %vm963 = vcmp.lt.s32.totalorder %v923, 107
        %v964 = vsel %vm963, %v960, %v962
        %v965 = vsel %vm963, %v958, %v960
        %v966 = vsel %vm963, %v956, %v958
        %v967 = vsel %vm963, %v962, %v956
        %968 = vrot.lane.b32.xlu0 %v910, 106
        %v969 = vpop.permute.xlu0 %968
        %970 = vrot.lane.b32.xlu0 %v911, 106
        %v971 = vpop.permute.xlu0 %970
        %972 = vrot.lane.b32.xlu0 %v912, 106
        %v973 = vpop.permute.xlu0 %972
        %974 = vrot.lane.b32.xlu0 %v913, 106
        %v975 = vpop.permute.xlu0 %974
        %vm976 = vcmp.lt.s32.totalorder %v923, 106
        %v977 = vsel %vm976, %v973, %v975
        %v978 = vsel %vm976, %v971, %v973
        %v979 = vsel %vm976, %v969, %v971
        %v980 = vsel %vm976, %v975, %v969
        %981 = vrot.lane.b32.xlu0 %v910, 88
        %v982 = vpop.permute.xlu0 %981
        %983 = vrot.lane.b32.xlu0 %v911, 88
        %v984 = vpop.permute.xlu0 %983
        %985 = vrot.lane.b32.xlu0 %v912, 88
        %v986 = vpop.permute.xlu0 %985
        %987 = vrot.lane.b32.xlu0 %v913, 88
        %v988 = vpop.permute.xlu0 %987
        %vm989 = vcmp.lt.s32.totalorder %v923, 88
        %v990 = vsel %vm989, %v986, %v988
        %v991 = vsel %vm989, %v984, %v986
        %v992 = vsel %vm989, %v982, %v984
        %v993 = vsel %vm989, %v988, %v982
        %994 = vrot.lane.b32.xlu0 %v910, 87
        %v995 = vpop.permute.xlu0 %994
        %996 = vrot.lane.b32.xlu0 %v911, 87
        %v997 = vpop.permute.xlu0 %996
        %998 = vrot.lane.b32.xlu0 %v912, 87
        %v999 = vpop.permute.xlu0 %998
        %1000 = vrot.lane.b32.xlu0 %v913, 87
        %v1001 = vpop.permute.xlu0 %1000
        %vm1002 = vcmp.lt.s32.totalorder %v923, 87
        %v1003 = vsel %vm1002, %v999, %v1001
        %v1004 = vsel %vm1002, %v997, %v999
        %v1005 = vsel %vm1002, %v995, %v997
        %v1006 = vsel %vm1002, %v1001, %v995
        %1007 = vrot.lane.b32.xlu0 %v910, 86
        %v1008 = vpop.permute.xlu0 %1007
        %1009 = vrot.lane.b32.xlu0 %v911, 86
        %v1010 = vpop.permute.xlu0 %1009
        %1011 = vrot.lane.b32.xlu0 %v912, 86
        %v1012 = vpop.permute.xlu0 %1011
        %1013 = vrot.lane.b32.xlu0 %v913, 86
        %v1014 = vpop.permute.xlu0 %1013
        %vm1015 = vcmp.lt.s32.totalorder %v923, 86
        %v1016 = vsel %vm1015, %v1012, %v1014
        %v1017 = vsel %vm1015, %v1010, %v1012
        %v1018 = vsel %vm1015, %v1008, %v1010
        %v1019 = vsel %vm1015, %v1014, %v1008
        %v1020 = vld [vmem:[%s3] sm:$0xff]
        %vm1021 = vcmask 588800
        %v1023 = vsel %vm1021, %v1020, 0
        %1025 = vmatprep.subr.mxu0 0.0
        %1026 = vmatpush1.msra.mxu0 0.0
        %1027 = vmatprep.subr.mxu0 0.0
        %1028 = vmatpush1.msra.mxu0 0.0
        %1029 = vmatprep.subr.mxu0 0.0
        %1030 = vmatpush1.msra.mxu0 0.0
        %1031 = vmatprep.subr.mxu0 0.0
        %1032 = vmatpush1.msra.mxu0 0.0
        %1033 = vmatprep.subr.mxu0 0.0
        %1034 = vmatpush1.msra.mxu0 0.0
        %1035 = vmatprep.subr.mxu0 0.0
        %1036 = vmatpush1.msra.mxu0 0.0
        %1037 = vmatprep.subr.mxu0 0.0
        %1038 = vmatpush1.msra.mxu0 0.0
        %1039 = vmatprep.subr.mxu0 %v1017
        %1040 = vmatpush1.msra.mxu0 %v1018
        %1041 = vmatprep.subr.mxu0 %v1004
        %1042 = vmatpush1.msra.mxu0 %v1005
        %1043 = vmatprep.subr.mxu0 %v991
        %1044 = vmatpush1.msra.mxu0 %v992
        %1045 = vmatprep.subr.mxu0 %v978
        %1046 = vmatpush1.msra.mxu0 %v979
        %1047 = vmatprep.subr.mxu0 %v965
        %1048 = vmatpush1.msra.mxu0 %v966
        %1049 = vmatprep.subr.mxu0 %v952
        %1050 = vmatpush1.msra.mxu0 %v953
        %1051 = vmatprep.subr.mxu0 %v939
        %1052 = vmatpush1.msra.mxu0 %v940
        %1053 = vmatprep.subr.mxu0 %v926
        %1054 = vmatpush1.msra.mxu0 %v927
        %1055 = vmatprep.subr.mxu0 %v911
        %1056 = vmatpush1.msra.mxu0 %v910
        %1057 = vmatprep.subr.mxu0 0.0
        %1058 = vmatpush2.msra.mxu0 0.0
        %1059 = vmatprep.subr.mxu0 0.0
        %1060 = vmatpush2.msra.mxu0 0.0
        %1061 = vmatprep.subr.mxu0 0.0
        %1062 = vmatpush2.msra.mxu0 0.0
        %1063 = vmatprep.subr.mxu0 0.0
        %1064 = vmatpush2.msra.mxu0 0.0
        %1065 = vmatprep.subr.mxu0 0.0
        %1066 = vmatpush2.msra.mxu0 0.0
        %1067 = vmatprep.subr.mxu0 0.0
        %1068 = vmatpush2.msra.mxu0 0.0
        %1069 = vmatprep.subr.mxu0 0.0
        %1070 = vmatpush2.msra.mxu0 0.0
        %1071 = vmatprep.subr.mxu0 0.0
        %1072 = vmatpush2.msra.mxu0 0.0
        %1073 = vmatprep.subr.mxu0 0.0
        %1074 = vmatpush2.msra.mxu0 0.0
        %1075 = vmatprep.subr.mxu0 0.0
        %1076 = vmatpush2.msra.mxu0 0.0
        %1077 = vmatprep.subr.mxu0 0.0
        %1078 = vmatpush2.msra.mxu0 0.0
        %1079 = vmatprep.subr.mxu0 0.0
        %1080 = vmatpush2.msra.mxu0 0.0
        %1081 = vmatprep.subr.mxu0 0.0
        %1082 = vmatpush2.msra.mxu0 0.0
        %1083 = vmatprep.subr.mxu0 0.0
        %1084 = vmatpush2.msra.mxu0 0.0
        %1085 = vmatprep.subr.mxu0 0.0
        %1086 = vmatpush2.msra.mxu0 0.0
        %1087 = vmatprep.subr.mxu0 0.0
        %1088 = vmatpush2.msra.mxu0 0.0
        %1089 = vmatprep.mubr.f32.mxu0 0.0
        %1090 = vmatmul.mubr.f32.gmra.mxu0 %v1023
        %v1091 = vpop.f32.mrf.mxu0
        %v1092 = vadd.f32 0.0, %v1091
        %v1093 = vpop.f32.mrf.mxu0
        %v1094 = vadd.f32 0.0, %v1093
        %1095 = vdwg.mxu0
        %1096 = vmatprep.subr.mxu0 0.0
        %1097 = vmatpush1.msra.mxu0 0.0
        %1098 = vmatprep.subr.mxu0 0.0
        %1099 = vmatpush1.msra.mxu0 0.0
        %1100 = vmatprep.subr.mxu0 0.0
        %1101 = vmatpush1.msra.mxu0 0.0
        %1102 = vmatprep.subr.mxu0 0.0
        %1103 = vmatpush1.msra.mxu0 0.0
        %1104 = vmatprep.subr.mxu0 0.0
        %1105 = vmatpush1.msra.mxu0 0.0
        %1106 = vmatprep.subr.mxu0 0.0
        %1107 = vmatpush1.msra.mxu0 0.0
        %1108 = vmatprep.subr.mxu0 0.0
        %1109 = vmatpush1.msra.mxu0 0.0
        %1110 = vmatprep.subr.mxu0 %v1019
        %1111 = vmatpush1.msra.mxu0 %v1016
        %1112 = vmatprep.subr.mxu0 %v1006
        %1113 = vmatpush1.msra.mxu0 %v1003
        %1114 = vmatprep.subr.mxu0 %v993
        %1115 = vmatpush1.msra.mxu0 %v990
        %1116 = vmatprep.subr.mxu0 %v980
        %1117 = vmatpush1.msra.mxu0 %v977
        %1118 = vmatprep.subr.mxu0 %v967
        %1119 = vmatpush1.msra.mxu0 %v964
        %1120 = vmatprep.subr.mxu0 %v954
        %1121 = vmatpush1.msra.mxu0 %v951
        %1122 = vmatprep.subr.mxu0 %v941
        %1123 = vmatpush1.msra.mxu0 %v938
        %1124 = vmatprep.subr.mxu0 %v928
        %1125 = vmatpush1.msra.mxu0 %v925
        %1126 = vmatprep.subr.mxu0 %v913
        %1127 = vmatpush1.msra.mxu0 %v912
        %1128 = vmatprep.subr.mxu0 0.0
        %1129 = vmatpush2.msra.mxu0 0.0
        %1130 = vmatprep.subr.mxu0 0.0
        %1131 = vmatpush2.msra.mxu0 0.0
        %1132 = vmatprep.subr.mxu0 0.0
        %1133 = vmatpush2.msra.mxu0 0.0
        %1134 = vmatprep.subr.mxu0 0.0
        %1135 = vmatpush2.msra.mxu0 0.0
        %1136 = vmatprep.subr.mxu0 0.0
        %1137 = vmatpush2.msra.mxu0 0.0
        %1138 = vmatprep.subr.mxu0 0.0
        %1139 = vmatpush2.msra.mxu0 0.0
        %1140 = vmatprep.subr.mxu0 0.0
        %1141 = vmatpush2.msra.mxu0 0.0
        %1142 = vmatprep.subr.mxu0 0.0
        %1143 = vmatpush2.msra.mxu0 0.0
        %1144 = vmatprep.subr.mxu0 0.0
        %1145 = vmatpush2.msra.mxu0 0.0
        %1146 = vmatprep.subr.mxu0 0.0
        %1147 = vmatpush2.msra.mxu0 0.0
        %1148 = vmatprep.subr.mxu0 0.0
        %1149 = vmatpush2.msra.mxu0 0.0
        %1150 = vmatprep.subr.mxu0 0.0
        %1151 = vmatpush2.msra.mxu0 0.0
        %1152 = vmatprep.subr.mxu0 0.0
        %1153 = vmatpush2.msra.mxu0 0.0
        %1154 = vmatprep.subr.mxu0 0.0
        %1155 = vmatpush2.msra.mxu0 0.0
        %1156 = vmatprep.subr.mxu0 0.0
        %1157 = vmatpush2.msra.mxu0 0.0
        %1158 = vmatprep.subr.mxu0 0.0
        %1159 = vmatpush2.msra.mxu0 0.0
        %1160 = vmatprep.mubr.f32.mxu0 0.0
        %1161 = vmatmul.mubr.f32.gmra.mxu0 %v1023
        %v1162 = vpop.f32.mrf.mxu0
        %v1163 = vadd.f32 0.0, %v1162
        %v1164 = vpop.f32.mrf.mxu0
        %v1165 = vadd.f32 0.0, %v1164
        %1166 = vdwg.mxu0
        %v1167 = vld [vmem:[#allocation3] sm:$0xff]
        %1169 = vset.pattern.permute.xlu0 0
        %1170 = vperm.xlu0 %1169, %v1167
        %v1171 = vpop.permute.xlu0 %1170
        %v1173 = vsub.f32 %v1092, %v1171
        %v1174 = vsub.f32 %v1094, %v1171
        %v1175 = vsub.f32 %v1163, %v1171
        %v1176 = vsub.f32 %v1165, %v1171
        %v1177 = vld [vmem:[#allocation4] sm:$0xff]
        %1179 = vset.pattern.permute.xlu0 0
        %1180 = vperm.xlu0 %1179, %v1177
        %v1181 = vpop.permute.xlu0 %1180
        %v1183 = vmul.f32 %v1173, %v1181
        %v1184 = vmul.f32 %v1174, %v1181
        %v1185 = vmul.f32 %v1175, %v1181
        %v1186 = vmul.f32 %v1176, %v1181
        %v1187 = vld [vmem:[%s359] sm:$0xff]
        %1189 = vset.pattern.permute.xlu0 0
        %1190 = vperm.xlu0 %1189, %v1187
        %v1191 = vpop.permute.xlu0 %1190
        %v1193 = vmul.f32 %v1191, %v1183
        %v1194 = vmul.f32 %v1191, %v1184
        %v1195 = vmul.f32 %v1191, %v1185
        %v1196 = vmul.f32 %v1191, %v1186
        %v1197 = vld [vmem:[%s363] sm:$0xff]
        %1199 = vset.pattern.permute.xlu0 0
        %1200 = vperm.xlu0 %1199, %v1197
        %v1201 = vpop.permute.xlu0 %1200
        %v1203 = vadd.f32 %v1193, %v1201
        %v1204 = vadd.f32 %v1194, %v1201
        %v1205 = vadd.f32 %v1195, %v1201
        %v1206 = vadd.f32 %v1196, %v1201
        %v1207 = vmax.f32 %v1203, 0.0
        %v1208 = vmax.f32 %v1204, 0.0
        %v1209 = vmax.f32 %v1205, 0.0
        %v1210 = vmax.f32 %v1206, 0.0
        %v1211 = vadd.f32 %v1207, %v966
        %v1212 = vadd.f32 %v1208, %v965
        %v1213 = vadd.f32 %v1209, %v964
        %v1214 = vadd.f32 %v1210, %v967
        %v1215 = vld [vmem:[%s7] sm:$0xf]
        %v1217 = vlaneseq
        %v1218 = vshrl.u32 %v1217, 7
        %v1219 = vsub.s32 0, %v1218
        %v1220 = vrot.slane %v1215, %v1219
        %v1221 = vlaneseq
        %v1222 = vshrl.u32 %v1221, 7
        %v1223 = vsub.s32 1, %v1222
        %v1224 = vrot.slane %v1215, %v1223
        %v1225 = vlaneseq
        %v1226 = vshrl.u32 %v1225, 7
        %v1227 = vsub.s32 2, %v1226
        %v1228 = vrot.slane %v1215, %v1227
        %v1229 = vlaneseq
        %v1230 = vshrl.u32 %v1229, 7
        %v1231 = vsub.s32 3, %v1230
        %v1232 = vrot.slane %v1215, %v1231
        %v1237 = vmul.f32 %v1211, %v1220
        %v1238 = vmul.f32 %v1212, %v1224
        %v1239 = vmul.f32 %v1213, %v1228
        %v1240 = vmul.f32 %v1214, %v1232
        %v1245 = vcombine.low %v1237, %v1238
        %v1246 = vcombine.low %v1239, %v1240
        %1249 = vst [vmem:[%s369] sm:$0xff] %v1245
        %1250 = vst [vmem:[%s369 + $0x8] sm:$0xff] %v1246
      $region64: #{resblock_forward.1} parent=51 // pred_fallthru
        _
      %s1251 = smul.u32 %s23, %s24
      %p1252 = scmp.lt.s32.totalorder %s1251, 1
      %s1253 = scalar_select %p1252, %s1251, 1
      %s1254 = smul.addr %s1253, 4
      %s1255 = smul.addr %s1254, 4
      %s1256 = scalar_lea.vmem %s8, %s1255
      // Predicated region
      $region69: #{resblock_forward.1} parent=51 // pred_check
        %p1257 = pneg %p238
      $region70: #{resblock_forward.1} parent=51 // pred_check_branch
        %1259 = sbr.rel (%p1257) target = $region72
      $region71: #{resblock_forward.1} parent=51 // pred_region
        %s1260 = smul.u32 %s23, %s24
      $region72: #{resblock_forward.1} parent=51 // pred_fallthru
        _
    $region52: #{resblock_forward.1} parent=5 // pred_fallthru
      _
    %p1261 = scmp.le.s32.totalorder 2, %s14
    // Predicated region
    $region73: #{resblock_forward.1} parent=5 // pred_check
      %p1262 = pneg %p1261
    $region74: #{resblock_forward.1} parent=5 // pred_check_branch
      %1264 = sbr.rel (%p1262) target = $region76
    $region75: #{resblock_forward.1} parent=5 // pred_region
      %s1265 = ssub.s32 %s14, 2
      // Predicated region
      $region77: #{resblock_forward.1} parent=75 // pred_check
        %p1266 = pneg %p244
      $region78: #{resblock_forward.1} parent=75 // pred_check_branch
        %1268 = sbr.rel (%p1266) target = $region80
      $region79: #{resblock_forward.1} parent=75 // pred_region
        %s1269 = smul.u32 %s25, %s26
        %p1270 = scmp.lt.s32.totalorder %s1269, 1
        %s1271 = scalar_select %p1270, %s1269, 1
        %s1272 = smul.addr %s1271, 4
        %s1273 = smul.addr %s1272, 4
        %s1274 = scalar_lea.vmem %s8, %s1273
      $region80: #{resblock_forward.1} parent=75 // pred_fallthru
        _
    $region76: #{resblock_forward.1} parent=5 // pred_fallthru
      _
  $region6: #{resblock_forward.1} parent=0 // loop_footer
    %s18 = sadd.s32 1, %s14
  $region7: #{resblock_forward.1} parent=0 // loop_footer_branch
    %13 = sbr.rel target = $region3
  $region8: #{resblock_forward.1} parent=0 // loop_exit
    _

</llo_original>
